<compile_context>
chip_gen: v5e
topology: v5e:2x2
jax: 0.10.0
libtpu: 0.0.40
codegen_flags: <defaults>
</compile_context>

<pallas_src>
import jax
import jax.numpy as jnp
from jax.experimental import pallas as pl
from jax.experimental.pallas import tpu as pltpu

BN_EPS = 1e-5


def _mlp_kernel(x_ref,
                w1_ref, b1_ref,
                w2_ref, b2_ref,
                w3_ref, b3_ref,
                w4_ref, b4_ref,
                o_ref):
    """Fused (fc1+bn1+relu) -> (fc2+bn2+relu) -> (fc3+bn3+relu) -> fc4.

    x_ref is a (tile_n, 5) batch tile in native layout; weights are
    pre-transposed to (in, out) with BN folded in, biases are (1, out) rows.
    """
    x = x_ref[...]                                                  # (tile_n, 5)

    # fc1 (5 -> 128) + folded bn1 + relu
    h = jnp.dot(x, w1_ref[...], preferred_element_type=jnp.float32) + b1_ref[...]
    h = jnp.maximum(h, 0.0)

    # fc2 (128 -> 32) + folded bn2 + relu
    h = jnp.dot(h, w2_ref[...], preferred_element_type=jnp.float32) + b2_ref[...]
    h = jnp.maximum(h, 0.0)

    # fc3 (32 -> 32) + folded bn3 + relu
    h = jnp.dot(h, w3_ref[...], preferred_element_type=jnp.float32) + b3_ref[...]
    h = jnp.maximum(h, 0.0)

    # fc4 (32 -> 2), no activation
    o_ref[...] = (jnp.dot(h, w4_ref[...], preferred_element_type=jnp.float32)
                  + b4_ref[...]).astype(o_ref.dtype)


def bgrxy_mlp_forward(x, kernel_params, *, tile_n=2048):
    """x: (N, 5) float32 (native nn.Linear layout). Returns (N, 2) float32."""
    N, f_in = x.shape
    assert f_in == 5

    (w1, b1, w2, b2, w3, b3, w4, b4) = kernel_params

    # Keep the batch tile a multiple of 8 sublanes and no larger than needed.
    tile_n = int(min(tile_n, -(-N // 8) * 8))
    tile_n = max(8, (tile_n // 8) * 8)

    grid = (pl.cdiv(N, tile_n),)     # last block may be partial: Pallas masks it

    whole = lambda i: (0, 0)
    in_specs = [
        pl.BlockSpec((tile_n, 5), lambda i: (i, 0)),    # x tile, native layout
        pl.BlockSpec(w1.shape, whole), pl.BlockSpec(b1.shape, whole),
        pl.BlockSpec(w2.shape, whole), pl.BlockSpec(b2.shape, whole),
        pl.BlockSpec(w3.shape, whole), pl.BlockSpec(b3.shape, whole),
        pl.BlockSpec(w4.shape, whole), pl.BlockSpec(b4.shape, whole),
    ]
    out_specs = pl.BlockSpec((tile_n, 2), lambda i: (i, 0))  # (N, 2) written directly

    # VMEM budget: double-buffered x/out tiles (lane-padded to 128) plus ~3
    # (tile_n, 128) f32 intermediates; clamp between 32 MiB and 56 MiB so large
    # tiles work on v5e's small scoped default without exceeding v7x's 64 MiB.
    vmem_est = 10 * tile_n * 128 * 4 + (2 << 20)
    vmem_limit = int(min(max(vmem_est, 32 << 20), 56 << 20))

    flops = 2 * N * (5 * 128 + 128 * 32 + 32 * 32 + 32 * 2)
    bytes_accessed = N * 5 * 4 + N * 2 * 4 + sum(int(p.size) * 4 for p in kernel_params)

    return pl.pallas_call(
        _mlp_kernel,
        out_shape=jax.ShapeDtypeStruct((N, 2), jnp.float32),
        grid=grid,
        in_specs=in_specs,
        out_specs=out_specs,
        compiler_params=pltpu.CompilerParams(
            dimension_semantics=("parallel",),
            vmem_limit_bytes=vmem_limit),
        cost_estimate=pl.CostEstimate(flops=flops, transcendentals=0,
                                      bytes_accessed=bytes_accessed),
    )(x, w1, b1, w2, b2, w3, b3, w4, b4)


# ---------------------------------------------------------------------------
# Parameter construction (PyTorch-native layout) and BN folding.
# ---------------------------------------------------------------------------
def _make_linear(key, fan_in, fan_out):
    """PyTorch-style uniform init for nn.Linear; weight is (out, in)."""
    kw, kb = jax.random.split(key)
    bound = 1.0 / jnp.sqrt(fan_in)
    w = jax.random.uniform(kw, (fan_out, fan_in), jnp.float32, -bound, bound)
    b = jax.random.uniform(kb, (fan_out,), jnp.float32, -bound, bound)
    return w, b


def _make_bn(key, feat):
    """Eval-mode BatchNorm1d parameters (gamma, beta, running_mean, running_var)."""
    kg, kb, km, kv = jax.random.split(key, 4)
    gamma = 1.0 + 0.1 * jax.random.normal(kg, (feat,), jnp.float32)
    beta = 0.1 * jax.random.normal(kb, (feat,), jnp.float32)
    run_mean = 0.1 * jax.random.normal(km, (feat,), jnp.float32)
    run_var = jnp.abs(1.0 + 0.1 * jax.random.normal(kv, (feat,), jnp.float32))
    return gamma, beta, run_mean, run_var


def init_torch_params(key):
    ks = jax.random.split(key, 7)
    fc1 = _make_linear(ks[0], 5, 128)
    bn1 = _make_bn(ks[1], 128)
    fc2 = _make_linear(ks[2], 128, 32)
    bn2 = _make_bn(ks[3], 32)
    fc3 = _make_linear(ks[4], 32, 32)
    bn3 = _make_bn(ks[5], 32)
    fc4 = _make_linear(ks[6], 32, 2)
    return fc1, bn1, fc2, bn2, fc3, bn3, fc4


def _fold_bn(w, b, bn):
    """Fold eval-mode BN into a preceding Linear; return (in,out) weight + (1,out) bias."""
    gamma, beta, mean, var = bn
    inv_std = 1.0 / jnp.sqrt(var + BN_EPS)
    s = gamma * inv_std                           # per-output-feature scale
    w_t = (w * s[:, None]).T                      # (in, out), pre-transposed for x @ W
    b_row = (s * b + (beta - s * mean))[None, :]  # (1, out) broadcast row
    return w_t, b_row


def prepare_kernel_params(torch_params):
    (fc1, bn1, fc2, bn2, fc3, bn3, fc4) = torch_params
    w1, b1 = _fold_bn(*fc1, bn1)
    w2, b2 = _fold_bn(*fc2, bn2)
    w3, b3 = _fold_bn(*fc3, bn3)
    w4 = fc4[0].T                                 # (32, 2)
    b4 = fc4[1][None, :]                          # (1, 2)
    return (w1, b1, w2, b2, w3, b3, w4, b4)


def reference_forward(x, torch_params):
    """Pure-JAX reference matching PyTorch BGRXYMLPNet_ in eval mode."""
    (fc1, bn1, fc2, bn2, fc3, bn3, fc4) = torch_params

    def lin(v, w, b):
        return v @ w.T + b

    def bn(v, p):
        gamma, beta, mean, var = p
        return (v - mean) / jnp.sqrt(var + BN_EPS) * gamma + beta

    h = jnp.maximum(bn(lin(x, *fc1), bn1), 0.0)
    h = jnp.maximum(bn(lin(h, *fc2), bn2), 0.0)
    h = jnp.maximum(bn(lin(h, *fc3), bn3), 0.0)
    return lin(h, *fc4)


if __name__ == "__main__":
    key = jax.random.PRNGKey(0)
    k_x, k_p = jax.random.split(key)

    # Small batch of per-pixel (B, G, R, X, Y) feature vectors.
    # N=1000 with tile_n=256 -> 4 grid steps, the last one ragged (exercises
    # the masked partial-block path with no jnp.pad copy).
    N = 1000
    x = jax.random.normal(k_x, (N, 5), jnp.float32)

    torch_params = init_torch_params(k_p)
    kernel_params = prepare_kernel_params(torch_params)

    out = bgrxy_mlp_forward(x, kernel_params, tile_n=256)
    out = jax.block_until_ready(out)

    ref = reference_forward(x, torch_params)
    assert out.shape == (N, 2)
    max_err = float(jnp.max(jnp.abs(out - ref)))
    assert jnp.allclose(out, ref, atol=1e-3, rtol=1e-3), (
        f"mismatch vs JAX reference, max abs err={max_err}")

    print("KERNEL_OK")
</pallas_src>

<mosaic_0001>
module attributes {stable_mosaic.version = 11 : i64} {
  func.func @_mlp_kernel(%arg0: i32, %arg1: memref<256x5xf32, #tpu.memory_space<vmem>>, %arg2: memref<5x128xf32, #tpu.memory_space<vmem>>, %arg3: memref<1x128xf32, #tpu.memory_space<vmem>>, %arg4: memref<128x32xf32, #tpu.memory_space<vmem>>, %arg5: memref<1x32xf32, #tpu.memory_space<vmem>>, %arg6: memref<32x32xf32, #tpu.memory_space<vmem>>, %arg7: memref<1x32xf32, #tpu.memory_space<vmem>>, %arg8: memref<32x2xf32, #tpu.memory_space<vmem>>, %arg9: memref<1x2xf32, #tpu.memory_space<vmem>>, %arg10: memref<256x2xf32, #tpu.memory_space<vmem>>) attributes {dimension_semantics = [#tpu.dimension_semantics<parallel>], iteration_bounds = array<i64: 4>, scalar_prefetch = 0 : i64, scratch_operands = 0 : i64, tpu.core_type = #tpu.core_type<tc>, window_params = [{transform_indices = @transform_0, window_bounds = array<i64: 256, 5>}, {pipeline_mode = #tpu.pipeline_mode<synchronous>, transform_indices = @transform_1, window_bounds = array<i64: 5, 128>}, {pipeline_mode = #tpu.pipeline_mode<synchronous>, transform_indices = @transform_2, window_bounds = array<i64: 1, 128>}, {pipeline_mode = #tpu.pipeline_mode<synchronous>, transform_indices = @transform_3, window_bounds = array<i64: 128, 32>}, {pipeline_mode = #tpu.pipeline_mode<synchronous>, transform_indices = @transform_4, window_bounds = array<i64: 1, 32>}, {pipeline_mode = #tpu.pipeline_mode<synchronous>, transform_indices = @transform_5, window_bounds = array<i64: 32, 32>}, {pipeline_mode = #tpu.pipeline_mode<synchronous>, transform_indices = @transform_6, window_bounds = array<i64: 1, 32>}, {pipeline_mode = #tpu.pipeline_mode<synchronous>, transform_indices = @transform_7, window_bounds = array<i64: 32, 2>}, {pipeline_mode = #tpu.pipeline_mode<synchronous>, transform_indices = @transform_8, window_bounds = array<i64: 1, 2>}, {transform_indices = @transform_9, window_bounds = array<i64: 256, 2>}]} {
    %c0 = arith.constant 0 : index
    %c0_0 = arith.constant 0 : index
    %0 = vector.load %arg1[%c0, %c0_0] : memref<256x5xf32, #tpu.memory_space<vmem>>, vector<256x5xf32>
    %c0_1 = arith.constant 0 : index
    %c0_2 = arith.constant 0 : index
    %1 = vector.load %arg2[%c0_1, %c0_2] : memref<5x128xf32, #tpu.memory_space<vmem>>, vector<5x128xf32>
    %cst = arith.constant dense<0.000000e+00> : vector<256x128xf32>
    %2 = tpu.matmul %0, %1, %cst {dimension_numbers = #tpu.dot_dimension_numbers<[1], [0], [0], [1], [0, 0, 1, 1], [], []>} : vector<256x5xf32>, vector<5x128xf32>, vector<256x128xf32> -> vector<256x128xf32>
    %c0_3 = arith.constant 0 : index
    %c0_4 = arith.constant 0 : index
    %3 = vector.load %arg3[%c0_3, %c0_4] : memref<1x128xf32, #tpu.memory_space<vmem>>, vector<1x128xf32>
    %4 = vector.broadcast %3 : vector<1x128xf32> to vector<256x128xf32>
    %5 = arith.addf %2, %4 : vector<256x128xf32>
    %cst_5 = arith.constant 0.000000e+00 : f32
    %6 = vector.broadcast %cst_5 : f32 to vector<256x128xf32>
    %7 = arith.maximumf %5, %6 : vector<256x128xf32>
    %c0_6 = arith.constant 0 : index
    %c0_7 = arith.constant 0 : index
    %8 = vector.load %arg4[%c0_6, %c0_7] : memref<128x32xf32, #tpu.memory_space<vmem>>, vector<128x32xf32>
    %cst_8 = arith.constant dense<0.000000e+00> : vector<256x32xf32>
    %9 = tpu.matmul %7, %8, %cst_8 {dimension_numbers = #tpu.dot_dimension_numbers<[1], [0], [0], [1], [0, 0, 1, 1], [], []>} : vector<256x128xf32>, vector<128x32xf32>, vector<256x32xf32> -> vector<256x32xf32>
    %c0_9 = arith.constant 0 : index
    %c0_10 = arith.constant 0 : index
    %10 = vector.load %arg5[%c0_9, %c0_10] : memref<1x32xf32, #tpu.memory_space<vmem>>, vector<1x32xf32>
    %11 = vector.broadcast %10 : vector<1x32xf32> to vector<256x32xf32>
    %12 = arith.addf %9, %11 : vector<256x32xf32>
    %cst_11 = arith.constant 0.000000e+00 : f32
    %13 = vector.broadcast %cst_11 : f32 to vector<256x32xf32>
    %14 = arith.maximumf %12, %13 : vector<256x32xf32>
    %c0_12 = arith.constant 0 : index
    %c0_13 = arith.constant 0 : index
    %15 = vector.load %arg6[%c0_12, %c0_13] : memref<32x32xf32, #tpu.memory_space<vmem>>, vector<32x32xf32>
    %cst_14 = arith.constant dense<0.000000e+00> : vector<256x32xf32>
    %16 = tpu.matmul %14, %15, %cst_14 {dimension_numbers = #tpu.dot_dimension_numbers<[1], [0], [0], [1], [0, 0, 1, 1], [], []>} : vector<256x32xf32>, vector<32x32xf32>, vector<256x32xf32> -> vector<256x32xf32>
    %c0_15 = arith.constant 0 : index
    %c0_16 = arith.constant 0 : index
    %17 = vector.load %arg7[%c0_15, %c0_16] : memref<1x32xf32, #tpu.memory_space<vmem>>, vector<1x32xf32>
    %18 = vector.broadcast %17 : vector<1x32xf32> to vector<256x32xf32>
    %19 = arith.addf %16, %18 : vector<256x32xf32>
    %cst_17 = arith.constant 0.000000e+00 : f32
    %20 = vector.broadcast %cst_17 : f32 to vector<256x32xf32>
    %21 = arith.maximumf %19, %20 : vector<256x32xf32>
    %c0_18 = arith.constant 0 : index
    %c0_19 = arith.constant 0 : index
    %22 = vector.load %arg8[%c0_18, %c0_19] : memref<32x2xf32, #tpu.memory_space<vmem>>, vector<32x2xf32>
    %cst_20 = arith.constant dense<0.000000e+00> : vector<256x2xf32>
    %23 = tpu.matmul %21, %22, %cst_20 {dimension_numbers = #tpu.dot_dimension_numbers<[1], [0], [0], [1], [0, 0, 1, 1], [], []>} : vector<256x32xf32>, vector<32x2xf32>, vector<256x2xf32> -> vector<256x2xf32>
    %c0_21 = arith.constant 0 : index
    %c0_22 = arith.constant 0 : index
    %24 = vector.load %arg9[%c0_21, %c0_22] : memref<1x2xf32, #tpu.memory_space<vmem>>, vector<1x2xf32>
    %25 = vector.broadcast %24 : vector<1x2xf32> to vector<256x2xf32>
    %26 = arith.addf %23, %25 : vector<256x2xf32>
    %c0_23 = arith.constant 0 : index
    %c0_24 = arith.constant 0 : index
    %27 = vector.load %arg10[%c0_23, %c0_24] : memref<256x2xf32, #tpu.memory_space<vmem>>, vector<256x2xf32>
    tpu.vector_store %arg10[%c0_23, %c0_24], %26 {strides = array<i32>} : memref<256x2xf32, #tpu.memory_space<vmem>>, vector<256x2xf32>,
    return
  }
  func.func @transform_0(%arg0: i32) -> (i32, i32) {
    %c0_i32 = arith.constant 0 : i32
    %c0_i32_0 = arith.constant 0 : i32
    return %arg0, %c0_i32 : i32, i32
  }
  func.func @transform_1(%arg0: i32) -> (i32, i32) {
    %c0_i32 = arith.constant 0 : i32
    %c0_i32_0 = arith.constant 0 : i32
    %c0_i32_1 = arith.constant 0 : i32
    return %c0_i32, %c0_i32_0 : i32, i32
  }
  func.func @transform_2(%arg0: i32) -> (i32, i32) {
    %c0_i32 = arith.constant 0 : i32
    %c0_i32_0 = arith.constant 0 : i32
    %c0_i32_1 = arith.constant 0 : i32
    return %c0_i32, %c0_i32_0 : i32, i32
  }
  func.func @transform_3(%arg0: i32) -> (i32, i32) {
    %c0_i32 = arith.constant 0 : i32
    %c0_i32_0 = arith.constant 0 : i32
    %c0_i32_1 = arith.constant 0 : i32
    return %c0_i32, %c0_i32_0 : i32, i32
  }
  func.func @transform_4(%arg0: i32) -> (i32, i32) {
    %c0_i32 = arith.constant 0 : i32
    %c0_i32_0 = arith.constant 0 : i32
    %c0_i32_1 = arith.constant 0 : i32
    return %c0_i32, %c0_i32_0 : i32, i32
  }
  func.func @transform_5(%arg0: i32) -> (i32, i32) {
    %c0_i32 = arith.constant 0 : i32
    %c0_i32_0 = arith.constant 0 : i32
    %c0_i32_1 = arith.constant 0 : i32
    return %c0_i32, %c0_i32_0 : i32, i32
  }
  func.func @transform_6(%arg0: i32) -> (i32, i32) {
    %c0_i32 = arith.constant 0 : i32
    %c0_i32_0 = arith.constant 0 : i32
    %c0_i32_1 = arith.constant 0 : i32
    return %c0_i32, %c0_i32_0 : i32, i32
  }
  func.func @transform_7(%arg0: i32) -> (i32, i32) {
    %c0_i32 = arith.constant 0 : i32
    %c0_i32_0 = arith.constant 0 : i32
    %c0_i32_1 = arith.constant 0 : i32
    return %c0_i32, %c0_i32_0 : i32, i32
  }
  func.func @transform_8(%arg0: i32) -> (i32, i32) {
    %c0_i32 = arith.constant 0 : i32
    %c0_i32_0 = arith.constant 0 : i32
    %c0_i32_1 = arith.constant 0 : i32
    return %c0_i32, %c0_i32_0 : i32, i32
  }
  func.func @transform_9(%arg0: i32) -> (i32, i32) {
    %c0_i32 = arith.constant 0 : i32
    %c0_i32_0 = arith.constant 0 : i32
    return %arg0, %c0_i32 : i32, i32
  }
}

</mosaic_0001>

<llo_original>
// kernel: tpu_custom_call.1
$region0: #{tpu_custom_call.1}
  #allocation0 [shape = 'u32[]', space=smem, size = 0x4, offset = 0x4, fixed_abs, tag = 'smem constant byte address 0x4 - core index']
  #allocation1 [shape = 'u32[72,128]{1,0:T(1,128)}', space=vmem, size = 0x9000, scoped, tag = 'internal scratch']
  %s0 = inlined_call_operand.vmem [shape: f32[1000,5], index: 0, kind: input, shape index: {}]
  %s1 = inlined_call_operand.vmem [shape: f32[5,128], index: 1, kind: input, shape index: {}]
  %s2 = inlined_call_operand.vmem [shape: f32[1,128], index: 2, kind: input, shape index: {}]
  %s3 = inlined_call_operand.vmem [shape: f32[128,32], index: 3, kind: input, shape index: {}]
  %s4 = inlined_call_operand.vmem [shape: f32[1,32], index: 4, kind: input, shape index: {}]
  %s5 = inlined_call_operand.vmem [shape: f32[32,32], index: 5, kind: input, shape index: {}]
  %s6 = inlined_call_operand.vmem [shape: f32[1,32], index: 6, kind: input, shape index: {}]
  %s7 = inlined_call_operand.vmem [shape: f32[32,2], index: 7, kind: input, shape index: {}]
  %s8 = inlined_call_operand.vmem [shape: f32[1,2], index: 8, kind: input, shape index: {}]
  %s9 = inlined_call_operand.vmem [shape: f32[1000,2], index: 9, kind: output, shape index: {}]
  %s10 = sld [smem:[#allocation0]]
  $region117: #{tpu_custom_call.1} parent=0
    _
  %s12 = ssub.s32 1, %s10
  %s13 = scalar_select 0, %s12, %s10
  $region1: #{tpu_custom_call.1} parent=0
    #allocation2 [shape = 'u8[262144]{0}', space=vmem, size = 0x40000, scoped, tag = 'output window, operand 0']
    loop: start=0, step=1, limit=6
    $region2: #{tpu_custom_call.1} parent=1 // loop_pre_header
      _
    $region3: #{tpu_custom_call.1} parent=1 // loop_header
      %s15 = sphi 0, %s19
      %p16 = scmp.ge.s32.totalorder %s15, 6
      %s25 = sphi 0, %s27
      %s28 = sphi 0, %s25
      %s29 = sphi 0, %s28
      %s45 = sphi 0, %s29
      %s49 = sphi 0, %s49
      %s51 = sphi 0, %s49
      %s52 = sphi 0, %s51
      %s66 = sphi 0, %s52
      %s70 = sphi 0, %s70
      %s72 = sphi 0, %s70
      %s73 = sphi 0, %s72
      %s87 = sphi 0, %s73
      %s91 = sphi 0, %s91
      %s93 = sphi 0, %s91
      %s94 = sphi 0, %s93
      %s108 = sphi 0, %s94
      %s112 = sphi 0, %s112
      %s114 = sphi 0, %s112
      %s115 = sphi 0, %s114
      %s129 = sphi 0, %s115
      %s133 = sphi 0, %s133
      %s135 = sphi 0, %s133
      %s136 = sphi 0, %s135
      %s150 = sphi 0, %s136
      %s154 = sphi 0, %s154
      %s156 = sphi 0, %s154
      %s157 = sphi 0, %s156
      %s171 = sphi 0, %s157
      %s175 = sphi 0, %s175
      %s177 = sphi 0, %s175
      %s178 = sphi 0, %s177
      %s192 = sphi 0, %s178
      %s196 = sphi 0, %s196
      %s198 = sphi 0, %s196
      %s199 = sphi 0, %s198
      %s213 = sphi 0, %s199
      %s219 = sphi 0, %s221
      %s222 = sphi 0, %s219
      %s223 = sphi 0, %s222
      %s239 = sphi 0, %s223
    $region4: #{tpu_custom_call.1} parent=1 // loop_header_branch
      %18 = sbr.rel (%p16) target = $region8
    $region5: #{tpu_custom_call.1} parent=1 // loop_body
      %s20 = ssub.s32 %s15, 1
      %s21 = ssub.s32 %s15, 2
      %s22 = sadd.s32 %s15, 1
      %s23 = ssub.s32 %s15, %s22
      %p24 = scmp.eq.s32.totalorder %s23, 0
      %s26 = sadd.s32 %s25, 1
      %s27 = scalar_select %p24, %s25, %s26
      %p30 = pneg %p24
      %p31 = scmp.eq.s32.totalorder %s15, 3
      %p32 = por %p30, %p31
      %p33 = scmp.ne.s32.totalorder %s25, %s28
      %p34 = scmp.eq.s32.totalorder %s15, 0
      %p35 = por %p33, %p34
      %p36 = scmp.ne.s32.totalorder %s25, %s28
      %p37 = scmp.eq.s32.totalorder %s20, 3
      %p38 = por %p36, %p37
      %p39 = scmp.ne.s32.totalorder %s28, %s29
      %p40 = scmp.eq.s32.totalorder %s20, 0
      %p41 = por %p39, %p40
      %p42 = scmp.ne.s32.totalorder %s28, %s29
      %p43 = scmp.eq.s32.totalorder %s21, 3
      %p44 = por %p42, %p43
      %p46 = scmp.ne.s32.totalorder %s29, %s45
      %p47 = scmp.eq.s32.totalorder %s21, 0
      %p48 = por %p46, %p47
      %s50 = sadd.s32 %s49, 1
      %p53 = scmp.eq.s32.totalorder %s15, 3
      %p54 = scmp.ne.s32.totalorder %s49, %s51
      %p55 = scmp.eq.s32.totalorder %s15, 0
      %p56 = por %p54, %p55
      %p57 = scmp.ne.s32.totalorder %s49, %s51
      %p58 = scmp.eq.s32.totalorder %s20, 3
      %p59 = por %p57, %p58
      %p60 = scmp.ne.s32.totalorder %s51, %s52
      %p61 = scmp.eq.s32.totalorder %s20, 0
      %p62 = por %p60, %p61
      %p63 = scmp.ne.s32.totalorder %s51, %s52
      %p64 = scmp.eq.s32.totalorder %s21, 3
      %p65 = por %p63, %p64
      %p67 = scmp.ne.s32.totalorder %s52, %s66
      %p68 = scmp.eq.s32.totalorder %s21, 0
      %p69 = por %p67, %p68
      %s71 = sadd.s32 %s70, 1
      %p74 = scmp.eq.s32.totalorder %s15, 3
      %p75 = scmp.ne.s32.totalorder %s70, %s72
      %p76 = scmp.eq.s32.totalorder %s15, 0
      %p77 = por %p75, %p76
      %p78 = scmp.ne.s32.totalorder %s70, %s72
      %p79 = scmp.eq.s32.totalorder %s20, 3
      %p80 = por %p78, %p79
      %p81 = scmp.ne.s32.totalorder %s72, %s73
      %p82 = scmp.eq.s32.totalorder %s20, 0
      %p83 = por %p81, %p82
      %p84 = scmp.ne.s32.totalorder %s72, %s73
      %p85 = scmp.eq.s32.totalorder %s21, 3
      %p86 = por %p84, %p85
      %p88 = scmp.ne.s32.totalorder %s73, %s87
      %p89 = scmp.eq.s32.totalorder %s21, 0
      %p90 = por %p88, %p89
      %s92 = sadd.s32 %s91, 1
      %p95 = scmp.eq.s32.totalorder %s15, 3
      %p96 = scmp.ne.s32.totalorder %s91, %s93
      %p97 = scmp.eq.s32.totalorder %s15, 0
      %p98 = por %p96, %p97
      %p99 = scmp.ne.s32.totalorder %s91, %s93
      %p100 = scmp.eq.s32.totalorder %s20, 3
      %p101 = por %p99, %p100
      %p102 = scmp.ne.s32.totalorder %s93, %s94
      %p103 = scmp.eq.s32.totalorder %s20, 0
      %p104 = por %p102, %p103
      %p105 = scmp.ne.s32.totalorder %s93, %s94
      %p106 = scmp.eq.s32.totalorder %s21, 3
      %p107 = por %p105, %p106
      %p109 = scmp.ne.s32.totalorder %s94, %s108
      %p110 = scmp.eq.s32.totalorder %s21, 0
      %p111 = por %p109, %p110
      %s113 = sadd.s32 %s112, 1
      %p116 = scmp.eq.s32.totalorder %s15, 3
      %p117 = scmp.ne.s32.totalorder %s112, %s114
      %p118 = scmp.eq.s32.totalorder %s15, 0
      %p119 = por %p117, %p118
      %p120 = scmp.ne.s32.totalorder %s112, %s114
      %p121 = scmp.eq.s32.totalorder %s20, 3
      %p122 = por %p120, %p121
      %p123 = scmp.ne.s32.totalorder %s114, %s115
      %p124 = scmp.eq.s32.totalorder %s20, 0
      %p125 = por %p123, %p124
      %p126 = scmp.ne.s32.totalorder %s114, %s115
      %p127 = scmp.eq.s32.totalorder %s21, 3
      %p128 = por %p126, %p127
      %p130 = scmp.ne.s32.totalorder %s115, %s129
      %p131 = scmp.eq.s32.totalorder %s21, 0
      %p132 = por %p130, %p131
      %s134 = sadd.s32 %s133, 1
      %p137 = scmp.eq.s32.totalorder %s15, 3
      %p138 = scmp.ne.s32.totalorder %s133, %s135
      %p139 = scmp.eq.s32.totalorder %s15, 0
      %p140 = por %p138, %p139
      %p141 = scmp.ne.s32.totalorder %s133, %s135
      %p142 = scmp.eq.s32.totalorder %s20, 3
      %p143 = por %p141, %p142
      %p144 = scmp.ne.s32.totalorder %s135, %s136
      %p145 = scmp.eq.s32.totalorder %s20, 0
      %p146 = por %p144, %p145
      %p147 = scmp.ne.s32.totalorder %s135, %s136
      %p148 = scmp.eq.s32.totalorder %s21, 3
      %p149 = por %p147, %p148
      %p151 = scmp.ne.s32.totalorder %s136, %s150
      %p152 = scmp.eq.s32.totalorder %s21, 0
      %p153 = por %p151, %p152
      %s155 = sadd.s32 %s154, 1
      %p158 = scmp.eq.s32.totalorder %s15, 3
      %p159 = scmp.ne.s32.totalorder %s154, %s156
      %p160 = scmp.eq.s32.totalorder %s15, 0
      %p161 = por %p159, %p160
      %p162 = scmp.ne.s32.totalorder %s154, %s156
      %p163 = scmp.eq.s32.totalorder %s20, 3
      %p164 = por %p162, %p163
      %p165 = scmp.ne.s32.totalorder %s156, %s157
      %p166 = scmp.eq.s32.totalorder %s20, 0
      %p167 = por %p165, %p166
      %p168 = scmp.ne.s32.totalorder %s156, %s157
      %p169 = scmp.eq.s32.totalorder %s21, 3
      %p170 = por %p168, %p169
      %p172 = scmp.ne.s32.totalorder %s157, %s171
      %p173 = scmp.eq.s32.totalorder %s21, 0
      %p174 = por %p172, %p173
      %s176 = sadd.s32 %s175, 1
      %p179 = scmp.eq.s32.totalorder %s15, 3
      %p180 = scmp.ne.s32.totalorder %s175, %s177
      %p181 = scmp.eq.s32.totalorder %s15, 0
      %p182 = por %p180, %p181
      %p183 = scmp.ne.s32.totalorder %s175, %s177
      %p184 = scmp.eq.s32.totalorder %s20, 3
      %p185 = por %p183, %p184
      %p186 = scmp.ne.s32.totalorder %s177, %s178
      %p187 = scmp.eq.s32.totalorder %s20, 0
      %p188 = por %p186, %p187
      %p189 = scmp.ne.s32.totalorder %s177, %s178
      %p190 = scmp.eq.s32.totalorder %s21, 3
      %p191 = por %p189, %p190
      %p193 = scmp.ne.s32.totalorder %s178, %s192
      %p194 = scmp.eq.s32.totalorder %s21, 0
      %p195 = por %p193, %p194
      %s197 = sadd.s32 %s196, 1
      %p200 = scmp.eq.s32.totalorder %s15, 3
      %p201 = scmp.ne.s32.totalorder %s196, %s198
      %p202 = scmp.eq.s32.totalorder %s15, 0
      %p203 = por %p201, %p202
      %p204 = scmp.ne.s32.totalorder %s196, %s198
      %p205 = scmp.eq.s32.totalorder %s20, 3
      %p206 = por %p204, %p205
      %p207 = scmp.ne.s32.totalorder %s198, %s199
      %p208 = scmp.eq.s32.totalorder %s20, 0
      %p209 = por %p207, %p208
      %p210 = scmp.ne.s32.totalorder %s198, %s199
      %p211 = scmp.eq.s32.totalorder %s21, 3
      %p212 = por %p210, %p211
      %p214 = scmp.ne.s32.totalorder %s199, %s213
      %p215 = scmp.eq.s32.totalorder %s21, 0
      %p216 = por %p214, %p215
      %s217 = ssub.s32 %s15, %s22
      %p218 = scmp.eq.s32.totalorder %s217, 0
      %s220 = sadd.s32 %s219, 1
      %s221 = scalar_select %p218, %s219, %s220
      %p224 = pneg %p218
      %p225 = scmp.eq.s32.totalorder %s15, 3
      %p226 = por %p224, %p225
      %p227 = scmp.ne.s32.totalorder %s219, %s222
      %p228 = scmp.eq.s32.totalorder %s15, 0
      %p229 = por %p227, %p228
      %p230 = scmp.ne.s32.totalorder %s219, %s222
      %p231 = scmp.eq.s32.totalorder %s20, 3
      %p232 = por %p230, %p231
      %p233 = scmp.ne.s32.totalorder %s222, %s223
      %p234 = scmp.eq.s32.totalorder %s20, 0
      %p235 = por %p233, %p234
      %p236 = scmp.ne.s32.totalorder %s222, %s223
      %p237 = scmp.eq.s32.totalorder %s21, 3
      %p238 = por %p236, %p237
      %p240 = scmp.ne.s32.totalorder %s223, %s239
      %p241 = scmp.eq.s32.totalorder %s21, 0
      %p242 = por %p240, %p241
      %p243 = scmp.le.s32.totalorder 1, %s15
      %p244 = scmp.lt.s32.totalorder %s15, 5
      %p245 = pnand %p243, %p244
      %p246 = pneg %p245
      // Predicated region
      $region9: #{tpu_custom_call.1} parent=5 // pred_check
        _
      $region10: #{tpu_custom_call.1} parent=5 // pred_check_branch
        %248 = sbr.rel (%p245) target = $region12
      $region11: #{tpu_custom_call.1} parent=5 // pred_region
        %s249 = ssub.s32 %s15, 1
        // Predicated region
        $region13: #{tpu_custom_call.1} parent=11 // pred_check
          %p250 = pneg %p62
        $region14: #{tpu_custom_call.1} parent=11 // pred_check_branch
          %252 = sbr.rel (%p250) target = $region16
        $region15: #{tpu_custom_call.1} parent=11 // pred_region
          _
        $region16: #{tpu_custom_call.1} parent=11 // pred_fallthru
          _
        // Predicated region
        $region17: #{tpu_custom_call.1} parent=11 // pred_check
          %p253 = pneg %p83
        $region18: #{tpu_custom_call.1} parent=11 // pred_check_branch
          %255 = sbr.rel (%p253) target = $region20
        $region19: #{tpu_custom_call.1} parent=11 // pred_region
          _
        $region20: #{tpu_custom_call.1} parent=11 // pred_fallthru
          _
        // Predicated region
        $region21: #{tpu_custom_call.1} parent=11 // pred_check
          %p256 = pneg %p104
        $region22: #{tpu_custom_call.1} parent=11 // pred_check_branch
          %258 = sbr.rel (%p256) target = $region24
        $region23: #{tpu_custom_call.1} parent=11 // pred_region
          _
        $region24: #{tpu_custom_call.1} parent=11 // pred_fallthru
          _
        // Predicated region
        $region25: #{tpu_custom_call.1} parent=11 // pred_check
          %p259 = pneg %p125
        $region26: #{tpu_custom_call.1} parent=11 // pred_check_branch
          %261 = sbr.rel (%p259) target = $region28
        $region27: #{tpu_custom_call.1} parent=11 // pred_region
          _
        $region28: #{tpu_custom_call.1} parent=11 // pred_fallthru
          _
        // Predicated region
        $region29: #{tpu_custom_call.1} parent=11 // pred_check
          %p262 = pneg %p146
        $region30: #{tpu_custom_call.1} parent=11 // pred_check_branch
          %264 = sbr.rel (%p262) target = $region32
        $region31: #{tpu_custom_call.1} parent=11 // pred_region
          _
        $region32: #{tpu_custom_call.1} parent=11 // pred_fallthru
          _
        // Predicated region
        $region33: #{tpu_custom_call.1} parent=11 // pred_check
          %p265 = pneg %p167
        $region34: #{tpu_custom_call.1} parent=11 // pred_check_branch
          %267 = sbr.rel (%p265) target = $region36
        $region35: #{tpu_custom_call.1} parent=11 // pred_region
          _
        $region36: #{tpu_custom_call.1} parent=11 // pred_fallthru
          _
        // Predicated region
        $region37: #{tpu_custom_call.1} parent=11 // pred_check
          %p268 = pneg %p188
        $region38: #{tpu_custom_call.1} parent=11 // pred_check_branch
          %270 = sbr.rel (%p268) target = $region40
        $region39: #{tpu_custom_call.1} parent=11 // pred_region
          _
        $region40: #{tpu_custom_call.1} parent=11 // pred_fallthru
          _
        // Predicated region
        $region41: #{tpu_custom_call.1} parent=11 // pred_check
          %p271 = pneg %p209
        $region42: #{tpu_custom_call.1} parent=11 // pred_check_branch
          %273 = sbr.rel (%p271) target = $region44
        $region43: #{tpu_custom_call.1} parent=11 // pred_region
          _
        $region44: #{tpu_custom_call.1} parent=11 // pred_fallthru
          _
      $region12: #{tpu_custom_call.1} parent=5 // pred_fallthru
        _
      %p274 = scmp.lt.s32.totalorder %s15, 4
      // Predicated region
      $region45: #{tpu_custom_call.1} parent=5 // pred_check
        %p275 = pneg %p274
      $region46: #{tpu_custom_call.1} parent=5 // pred_check_branch
        %277 = sbr.rel (%p275) target = $region48
      $region47: #{tpu_custom_call.1} parent=5 // pred_region
        // Predicated region
        $region49: #{tpu_custom_call.1} parent=47 // pred_check
          %p278 = pneg %p35
        $region50: #{tpu_custom_call.1} parent=47 // pred_check_branch
          %280 = sbr.rel (%p278) target = $region52
        $region51: #{tpu_custom_call.1} parent=47 // pred_region
          %s281 = smul.u32 32, %s15
          %s282 = ssub.s32 125, %s281
          %p283 = scmp.lt.s32.totalorder %s282, 32
          %s284 = scalar_select %p283, %s282, 32
          %s285 = smul.u32 8, %s284
          %p286 = scmp.lt.s32.totalorder %s281, 124
          %s287 = scalar_select %p286, %s281, 124
          %s288 = smul.addr %s287, 8
          %s289 = scalar_lea.vmem %s0, %s288
          %s290 = smul.u32 32, %s15
          %s291 = ssub.s32 125, %s290
          %p292 = scmp.lt.s32.totalorder %s291, 32
          %s293 = scalar_select %p292, %s291, 32
          %s294 = smul.u32 8, %s293
        $region52: #{tpu_custom_call.1} parent=47 // pred_fallthru
          _
      $region48: #{tpu_custom_call.1} parent=5 // pred_fallthru
        _
      %p295 = scmp.le.s32.totalorder 1, %s15
      %p296 = scmp.lt.s32.totalorder %s15, 5
      %p297 = pnand %p295, %p296
      %p298 = pneg %p297
      // Predicated region
      $region53: #{tpu_custom_call.1} parent=5 // pred_check
        _
      $region54: #{tpu_custom_call.1} parent=5 // pred_check_branch
        %300 = sbr.rel (%p297) target = $region56
      $region55: #{tpu_custom_call.1} parent=5 // pred_region
        %s301 = ssub.s32 %s15, 1
        %s302 = smul.u32 32, %s20
        %s303 = ssub.s32 125, %s302
        %p304 = scmp.lt.s32.totalorder %s303, 32
        %s305 = scalar_select %p304, %s303, 32
        %s306 = smul.u32 8, %s305
        %p307 = scmp.lt.s32.totalorder %s302, 124
        %s308 = scalar_select %p307, %s302, 124
        %s309 = smul.addr %s308, 8
        %s310 = scalar_lea.vmem %s0, %s309
        %p311 = pneg %p41
        %p312 = pneg %p38
        %p313 = pneg %p62
        %p314 = pneg %p59
        %p315 = pneg %p83
        %p316 = pneg %p80
        %p317 = pneg %p104
        %p318 = pneg %p101
        %p319 = pneg %p125
        %p320 = pneg %p122
        %p321 = pneg %p146
        %p322 = pneg %p143
        %p323 = pneg %p167
        %p324 = pneg %p164
        %p325 = pneg %p188
        %p326 = pneg %p185
        %p327 = pneg %p209
        %p328 = pneg %p206
        %p329 = pneg %p235
        %p330 = pneg %p232
        %s331 = sand.u32 %s222, 1
        %s332 = sand.u32 %s222, 1
        %s333 = smul.addr %s332, 256
        %s334 = scalar_lea.vmem [#allocation2], %s333
        %s335 = smul.u32 32, %s20
        %s336 = ssub.s32 125, %s335
        %p337 = scmp.lt.s32.totalorder %s336, 32
        %s338 = scalar_select %p337, %s336, 32
        %s339 = smul.u32 8, %s338
        %p340 = scmp.lt.s32.totalorder %s335, 124
        %s341 = scalar_select %p340, %s335, 124
        %s342 = smul.addr %s341, 8
        %s343 = scalar_lea.vmem %s0, %s342
        %s344 = smul.u32 32, %s20
        %s345 = ssub.s32 125, %s344
        %p346 = scmp.lt.s32.totalorder %s345, 32
        %s347 = scalar_select %p346, %s345, 32
        %s348 = smul.u32 8, %s347
        %s349 = smul.u32 32, %s20
        %s350 = ssub.s32 125, %s349
        %p351 = scmp.lt.s32.totalorder %s350, 32
        %s352 = scalar_select %p351, %s350, 32
        %s353 = smul.u32 8, %s352
        %v354 = vld [vmem:[%s343] sm:$0xff]
        %v355 = vld [vmem:[%s343 + $0x8] sm:$0xff]
        %v356 = vld [vmem:[%s343 + $0x10] sm:$0xff]
        %v357 = vld [vmem:[%s343 + $0x18] sm:$0xff]
        %v358 = vld [vmem:[%s343 + $0x20] sm:$0xff]
        %v359 = vld [vmem:[%s343 + $0x28] sm:$0xff]
        %v360 = vld [vmem:[%s343 + $0x30] sm:$0xff]
        %v361 = vld [vmem:[%s343 + $0x38] sm:$0xff]
        %v362 = vld [vmem:[%s343 + $0x40] sm:$0xff]
        %v363 = vld [vmem:[%s343 + $0x48] sm:$0xff]
        %v364 = vld [vmem:[%s343 + $0x50] sm:$0xff]
        %v365 = vld [vmem:[%s343 + $0x58] sm:$0xff]
        %v366 = vld [vmem:[%s343 + $0x60] sm:$0xff]
        %v367 = vld [vmem:[%s343 + $0x68] sm:$0xff]
        %v368 = vld [vmem:[%s343 + $0x70] sm:$0xff]
        %v369 = vld [vmem:[%s343 + $0x78] sm:$0xff]
        %v370 = vld [vmem:[%s343 + $0x80] sm:$0xff]
        %v371 = vld [vmem:[%s343 + $0x88] sm:$0xff]
        %v372 = vld [vmem:[%s343 + $0x90] sm:$0xff]
        %v373 = vld [vmem:[%s343 + $0x98] sm:$0xff]
        %v374 = vld [vmem:[%s343 + $0xa0] sm:$0xff]
        %v375 = vld [vmem:[%s343 + $0xa8] sm:$0xff]
        %v376 = vld [vmem:[%s343 + $0xb0] sm:$0xff]
        %v377 = vld [vmem:[%s343 + $0xb8] sm:$0xff]
        %v378 = vld [vmem:[%s343 + $0xc0] sm:$0xff]
        %v379 = vld [vmem:[%s343 + $0xc8] sm:$0xff]
        %v380 = vld [vmem:[%s343 + $0xd0] sm:$0xff]
        %v381 = vld [vmem:[%s343 + $0xd8] sm:$0xff]
        %v382 = vld [vmem:[%s343 + $0xe0] sm:$0xff]
        %v383 = vld [vmem:[%s343 + $0xe8] sm:$0xff]
        %v384 = vld [vmem:[%s343 + $0xf0] sm:$0xff]
        %v385 = vld [vmem:[%s343 + $0xf8] sm:$0xff]
        %v386 = vld [vmem:[%s1] sm:$0x1f]
        %v387 = vld [vmem:[%s2] sm:$0x1]
        %v389 = vperm.slane %v387, 0
        %vm391 = vcmask 39936
        %v393 = vsel %vm391, %v354, 0
        %v396 = vsel %vm391, %v355, 0
        %v399 = vsel %vm391, %v356, 0
        %v402 = vsel %vm391, %v357, 0
        %v405 = vsel %vm391, %v358, 0
        %v408 = vsel %vm391, %v359, 0
        %v411 = vsel %vm391, %v360, 0
        %v414 = vsel %vm391, %v361, 0
        %v417 = vsel %vm391, %v362, 0
        %v420 = vsel %vm391, %v363, 0
        %v423 = vsel %vm391, %v364, 0
        %v426 = vsel %vm391, %v365, 0
        %v429 = vsel %vm391, %v366, 0
        %v432 = vsel %vm391, %v367, 0
        %v435 = vsel %vm391, %v368, 0
        %v438 = vsel %vm391, %v369, 0
        %v441 = vsel %vm391, %v370, 0
        %v444 = vsel %vm391, %v371, 0
        %v447 = vsel %vm391, %v372, 0
        %v450 = vsel %vm391, %v373, 0
        %v453 = vsel %vm391, %v374, 0
        %v456 = vsel %vm391, %v375, 0
        %v459 = vsel %vm391, %v376, 0
        %v462 = vsel %vm391, %v377, 0
        %v465 = vsel %vm391, %v378, 0
        %v468 = vsel %vm391, %v379, 0
        %v471 = vsel %vm391, %v380, 0
        %v474 = vsel %vm391, %v381, 0
        %v477 = vsel %vm391, %v382, 0
        %v480 = vsel %vm391, %v383, 0
        %v483 = vsel %vm391, %v384, 0
        %v486 = vsel %vm391, %v385, 0
        %vm488 = vcmask 1044480
        %v490 = vsel %vm488, %v386, 0
        %492 = vmatpush.msra.mxu0 0.0
        %493 = vmatpush.msra.mxu0 0.0
        %494 = vmatpush.msra.mxu0 0.0
        %495 = vmatpush.msra.mxu0 0.0
        %496 = vmatpush.msra.mxu0 0.0
        %497 = vmatpush.msra.mxu0 0.0
        %498 = vmatpush.msra.mxu0 0.0
        %499 = vmatpush.msra.mxu0 0.0
        %500 = vmatpush.msra.mxu0 0.0
        %501 = vmatpush.msra.mxu0 0.0
        %502 = vmatpush.msra.mxu0 0.0
        %503 = vmatpush.msra.mxu0 0.0
        %504 = vmatpush.msra.mxu0 0.0
        %505 = vmatpush.msra.mxu0 0.0
        %506 = vmatpush.msra.mxu0 0.0
        %507 = vmatpush.msra.mxu0 %v490
        %508 = vmatmul.f32.gmra.mxu0 %v393
        %v509 = vpop.f32.mrf.mxu0
        %v510 = vadd.f32 %v389, %v509
        %511 = vmatmul.f32.gmra.mxu0 %v396
        %v512 = vpop.f32.mrf.mxu0
        %v513 = vadd.f32 %v389, %v512
        %514 = vmatmul.f32.gmra.mxu0 %v399
        %v515 = vpop.f32.mrf.mxu0
        %v516 = vadd.f32 %v389, %v515
        %517 = vmatmul.f32.gmra.mxu0 %v402
        %v518 = vpop.f32.mrf.mxu0
        %v519 = vadd.f32 %v389, %v518
        %520 = vmatmul.f32.gmra.mxu0 %v405
        %v521 = vpop.f32.mrf.mxu0
        %v522 = vadd.f32 %v389, %v521
        %523 = vmatmul.f32.gmra.mxu0 %v408
        %v524 = vpop.f32.mrf.mxu0
        %v525 = vadd.f32 %v389, %v524
        %526 = vmatmul.f32.gmra.mxu0 %v411
        %v527 = vpop.f32.mrf.mxu0
        %v528 = vadd.f32 %v389, %v527
        %529 = vmatmul.f32.gmra.mxu0 %v414
        %v530 = vpop.f32.mrf.mxu0
        %v531 = vadd.f32 %v389, %v530
        %532 = vmatmul.f32.gmra.mxu0 %v417
        %v533 = vpop.f32.mrf.mxu0
        %v534 = vadd.f32 %v389, %v533
        %535 = vmatmul.f32.gmra.mxu0 %v420
        %v536 = vpop.f32.mrf.mxu0
        %v537 = vadd.f32 %v389, %v536
        %538 = vmatmul.f32.gmra.mxu0 %v423
        %v539 = vpop.f32.mrf.mxu0
        %v540 = vadd.f32 %v389, %v539
        %541 = vmatmul.f32.gmra.mxu0 %v426
        %v542 = vpop.f32.mrf.mxu0
        %v543 = vadd.f32 %v389, %v542
        %544 = vmatmul.f32.gmra.mxu0 %v429
        %v545 = vpop.f32.mrf.mxu0
        %v546 = vadd.f32 %v389, %v545
        %547 = vmatmul.f32.gmra.mxu0 %v432
        %v548 = vpop.f32.mrf.mxu0
        %v549 = vadd.f32 %v389, %v548
        %550 = vmatmul.f32.gmra.mxu0 %v435
        %v551 = vpop.f32.mrf.mxu0
        %v552 = vadd.f32 %v389, %v551
        %553 = vmatmul.f32.gmra.mxu0 %v438
        %v554 = vpop.f32.mrf.mxu0
        %v555 = vadd.f32 %v389, %v554
        %556 = vmatmul.f32.gmra.mxu0 %v441
        %v557 = vpop.f32.mrf.mxu0
        %v558 = vadd.f32 %v389, %v557
        %559 = vmatmul.f32.gmra.mxu0 %v444
        %v560 = vpop.f32.mrf.mxu0
        %v561 = vadd.f32 %v389, %v560
        %562 = vmatmul.f32.gmra.mxu0 %v447
        %v563 = vpop.f32.mrf.mxu0
        %v564 = vadd.f32 %v389, %v563
        %565 = vmatmul.f32.gmra.mxu0 %v450
        %v566 = vpop.f32.mrf.mxu0
        %v567 = vadd.f32 %v389, %v566
        %568 = vmatmul.f32.gmra.mxu0 %v453
        %v569 = vpop.f32.mrf.mxu0
        %v570 = vadd.f32 %v389, %v569
        %571 = vmatmul.f32.gmra.mxu0 %v456
        %v572 = vpop.f32.mrf.mxu0
        %v573 = vadd.f32 %v389, %v572
        %574 = vmatmul.f32.gmra.mxu0 %v459
        %v575 = vpop.f32.mrf.mxu0
        %v576 = vadd.f32 %v389, %v575
        %577 = vmatmul.f32.gmra.mxu0 %v462
        %v578 = vpop.f32.mrf.mxu0
        %v579 = vadd.f32 %v389, %v578
        %580 = vmatmul.f32.gmra.mxu0 %v465
        %v581 = vpop.f32.mrf.mxu0
        %v582 = vadd.f32 %v389, %v581
        %583 = vmatmul.f32.gmra.mxu0 %v468
        %v584 = vpop.f32.mrf.mxu0
        %v585 = vadd.f32 %v389, %v584
        %586 = vmatmul.f32.gmra.mxu0 %v471
        %v587 = vpop.f32.mrf.mxu0
        %v588 = vadd.f32 %v389, %v587
        %589 = vmatmul.f32.gmra.mxu0 %v474
        %v590 = vpop.f32.mrf.mxu0
        %v591 = vadd.f32 %v389, %v590
        %592 = vmatmul.f32.gmra.mxu0 %v477
        %v593 = vpop.f32.mrf.mxu0
        %v594 = vadd.f32 %v389, %v593
        %595 = vmatmul.f32.gmra.mxu0 %v480
        %v596 = vpop.f32.mrf.mxu0
        %v597 = vadd.f32 %v389, %v596
        %598 = vmatmul.f32.gmra.mxu0 %v483
        %v599 = vpop.f32.mrf.mxu0
        %v600 = vadd.f32 %v389, %v599
        %601 = vmatmul.f32.gmra.mxu0 %v486
        %v602 = vpop.f32.mrf.mxu0
        %v603 = vadd.f32 %v389, %v602
        %604 = vdwg.mxu0
        %v605 = vmax.f32 %v510, 0.0
        %v606 = vmax.f32 %v513, 0.0
        %v607 = vmax.f32 %v516, 0.0
        %v608 = vmax.f32 %v519, 0.0
        %v609 = vmax.f32 %v522, 0.0
        %v610 = vmax.f32 %v525, 0.0
        %v611 = vmax.f32 %v528, 0.0
        %v612 = vmax.f32 %v531, 0.0
        %v613 = vmax.f32 %v534, 0.0
        %v614 = vmax.f32 %v537, 0.0
        %v615 = vmax.f32 %v540, 0.0
        %v616 = vmax.f32 %v543, 0.0
        %v617 = vmax.f32 %v546, 0.0
        %v618 = vmax.f32 %v549, 0.0
        %v619 = vmax.f32 %v552, 0.0
        %v620 = vmax.f32 %v555, 0.0
        %v621 = vmax.f32 %v558, 0.0
        %v622 = vmax.f32 %v561, 0.0
        %v623 = vmax.f32 %v564, 0.0
        %v624 = vmax.f32 %v567, 0.0
        %v625 = vmax.f32 %v570, 0.0
        %v626 = vmax.f32 %v573, 0.0
        %v627 = vmax.f32 %v576, 0.0
        %v628 = vmax.f32 %v579, 0.0
        %v629 = vmax.f32 %v582, 0.0
        %v630 = vmax.f32 %v585, 0.0
        %v631 = vmax.f32 %v588, 0.0
        %v632 = vmax.f32 %v591, 0.0
        %v633 = vmax.f32 %v594, 0.0
        %v634 = vmax.f32 %v597, 0.0
        %v635 = vmax.f32 %v600, 0.0
        %v636 = vmax.f32 %v603, 0.0
        %v637 = vld [vmem:[%s3] sm:$0xff]
        %v638 = vld [vmem:[%s3 + $0x8] sm:$0xff]
        %v639 = vld [vmem:[%s3 + $0x10] sm:$0xff]
        %v640 = vld [vmem:[%s3 + $0x18] sm:$0xff]
        %v641 = vld [vmem:[%s3 + $0x20] sm:$0xff]
        %v642 = vld [vmem:[%s3 + $0x28] sm:$0xff]
        %v643 = vld [vmem:[%s3 + $0x30] sm:$0xff]
        %v644 = vld [vmem:[%s3 + $0x38] sm:$0xff]
        %v645 = vld [vmem:[%s3 + $0x40] sm:$0xff]
        %v646 = vld [vmem:[%s3 + $0x48] sm:$0xff]
        %v647 = vld [vmem:[%s3 + $0x50] sm:$0xff]
        %v648 = vld [vmem:[%s3 + $0x58] sm:$0xff]
        %v649 = vld [vmem:[%s3 + $0x60] sm:$0xff]
        %v650 = vld [vmem:[%s3 + $0x68] sm:$0xff]
        %v651 = vld [vmem:[%s3 + $0x70] sm:$0xff]
        %v652 = vld [vmem:[%s3 + $0x78] sm:$0xff]
        %v653 = vld [vmem:[%s4] sm:$0x1]
        %v655 = vperm.slane %v653, 0
        %657 = vmatpush.msra.mxu0 %v652
        %658 = vmatpush.msra.mxu0 %v651
        %659 = vmatpush.msra.mxu0 %v650
        %660 = vmatpush.msra.mxu0 %v649
        %661 = vmatpush.msra.mxu0 %v648
        %662 = vmatpush.msra.mxu0 %v647
        %663 = vmatpush.msra.mxu0 %v646
        %664 = vmatpush.msra.mxu0 %v645
        %665 = vmatpush.msra.mxu0 %v644
        %666 = vmatpush.msra.mxu0 %v643
        %667 = vmatpush.msra.mxu0 %v642
        %668 = vmatpush.msra.mxu0 %v641
        %669 = vmatpush.msra.mxu0 %v640
        %670 = vmatpush.msra.mxu0 %v639
        %671 = vmatpush.msra.mxu0 %v638
        %672 = vmatpush.msra.mxu0 %v637
        %673 = vmatmul.f32.gmra.mxu0 %v605
        %v674 = vpop.f32.mrf.mxu0
        %v675 = vadd.f32 %v655, %v674
        %676 = vmatmul.f32.gmra.mxu0 %v606
        %v677 = vpop.f32.mrf.mxu0
        %v678 = vadd.f32 %v655, %v677
        %679 = vmatmul.f32.gmra.mxu0 %v607
        %v680 = vpop.f32.mrf.mxu0
        %v681 = vadd.f32 %v655, %v680
        %682 = vmatmul.f32.gmra.mxu0 %v608
        %v683 = vpop.f32.mrf.mxu0
        %v684 = vadd.f32 %v655, %v683
        %685 = vmatmul.f32.gmra.mxu0 %v609
        %v686 = vpop.f32.mrf.mxu0
        %v687 = vadd.f32 %v655, %v686
        %688 = vmatmul.f32.gmra.mxu0 %v610
        %v689 = vpop.f32.mrf.mxu0
        %v690 = vadd.f32 %v655, %v689
        %691 = vmatmul.f32.gmra.mxu0 %v611
        %v692 = vpop.f32.mrf.mxu0
        %v693 = vadd.f32 %v655, %v692
        %694 = vmatmul.f32.gmra.mxu0 %v612
        %v695 = vpop.f32.mrf.mxu0
        %v696 = vadd.f32 %v655, %v695
        %697 = vmatmul.f32.gmra.mxu0 %v613
        %v698 = vpop.f32.mrf.mxu0
        %v699 = vadd.f32 %v655, %v698
        %700 = vmatmul.f32.gmra.mxu0 %v614
        %v701 = vpop.f32.mrf.mxu0
        %v702 = vadd.f32 %v655, %v701
        %703 = vmatmul.f32.gmra.mxu0 %v615
        %v704 = vpop.f32.mrf.mxu0
        %v705 = vadd.f32 %v655, %v704
        %706 = vmatmul.f32.gmra.mxu0 %v616
        %v707 = vpop.f32.mrf.mxu0
        %v708 = vadd.f32 %v655, %v707
        %709 = vmatmul.f32.gmra.mxu0 %v617
        %v710 = vpop.f32.mrf.mxu0
        %v711 = vadd.f32 %v655, %v710
        %712 = vmatmul.f32.gmra.mxu0 %v618
        %v713 = vpop.f32.mrf.mxu0
        %v714 = vadd.f32 %v655, %v713
        %715 = vmatmul.f32.gmra.mxu0 %v619
        %v716 = vpop.f32.mrf.mxu0
        %v717 = vadd.f32 %v655, %v716
        %718 = vmatmul.f32.gmra.mxu0 %v620
        %v719 = vpop.f32.mrf.mxu0
        %v720 = vadd.f32 %v655, %v719
        %721 = vmatmul.f32.gmra.mxu0 %v621
        %v722 = vpop.f32.mrf.mxu0
        %v723 = vadd.f32 %v655, %v722
        %724 = vmatmul.f32.gmra.mxu0 %v622
        %v725 = vpop.f32.mrf.mxu0
        %v726 = vadd.f32 %v655, %v725
        %727 = vmatmul.f32.gmra.mxu0 %v623
        %v728 = vpop.f32.mrf.mxu0
        %v729 = vadd.f32 %v655, %v728
        %730 = vmatmul.f32.gmra.mxu0 %v624
        %v731 = vpop.f32.mrf.mxu0
        %v732 = vadd.f32 %v655, %v731
        %733 = vmatmul.f32.gmra.mxu0 %v625
        %v734 = vpop.f32.mrf.mxu0
        %v735 = vadd.f32 %v655, %v734
        %736 = vmatmul.f32.gmra.mxu0 %v626
        %v737 = vpop.f32.mrf.mxu0
        %v738 = vadd.f32 %v655, %v737
        %739 = vmatmul.f32.gmra.mxu0 %v627
        %v740 = vpop.f32.mrf.mxu0
        %v741 = vadd.f32 %v655, %v740
        %742 = vmatmul.f32.gmra.mxu0 %v628
        %v743 = vpop.f32.mrf.mxu0
        %v744 = vadd.f32 %v655, %v743
        %745 = vmatmul.f32.gmra.mxu0 %v629
        %v746 = vpop.f32.mrf.mxu0
        %v747 = vadd.f32 %v655, %v746
        %748 = vmatmul.f32.gmra.mxu0 %v630
        %v749 = vpop.f32.mrf.mxu0
        %v750 = vadd.f32 %v655, %v749
        %751 = vmatmul.f32.gmra.mxu0 %v631
        %v752 = vpop.f32.mrf.mxu0
        %v753 = vadd.f32 %v655, %v752
        %754 = vmatmul.f32.gmra.mxu0 %v632
        %v755 = vpop.f32.mrf.mxu0
        %v756 = vadd.f32 %v655, %v755
        %757 = vmatmul.f32.gmra.mxu0 %v633
        %v758 = vpop.f32.mrf.mxu0
        %v759 = vadd.f32 %v655, %v758
        %760 = vmatmul.f32.gmra.mxu0 %v634
        %v761 = vpop.f32.mrf.mxu0
        %v762 = vadd.f32 %v655, %v761
        %763 = vmatmul.f32.gmra.mxu0 %v635
        %v764 = vpop.f32.mrf.mxu0
        %v765 = vadd.f32 %v655, %v764
        %766 = vmatmul.f32.gmra.mxu0 %v636
        %v767 = vpop.f32.mrf.mxu0
        %v768 = vadd.f32 %v655, %v767
        %769 = vdwg.mxu0
        %v770 = vmax.f32 %v675, 0.0
        %v771 = vmax.f32 %v678, 0.0
        %v772 = vmax.f32 %v681, 0.0
        %v773 = vmax.f32 %v684, 0.0
        %v774 = vmax.f32 %v687, 0.0
        %v775 = vmax.f32 %v690, 0.0
        %v776 = vmax.f32 %v693, 0.0
        %v777 = vmax.f32 %v696, 0.0
        %v778 = vmax.f32 %v699, 0.0
        %v779 = vmax.f32 %v702, 0.0
        %v780 = vmax.f32 %v705, 0.0
        %v781 = vmax.f32 %v708, 0.0
        %v782 = vmax.f32 %v711, 0.0
        %v783 = vmax.f32 %v714, 0.0
        %v784 = vmax.f32 %v717, 0.0
        %v785 = vmax.f32 %v720, 0.0
        %v786 = vmax.f32 %v723, 0.0
        %v787 = vmax.f32 %v726, 0.0
        %v788 = vmax.f32 %v729, 0.0
        %v789 = vmax.f32 %v732, 0.0
        %v790 = vmax.f32 %v735, 0.0
        %v791 = vmax.f32 %v738, 0.0
        %v792 = vmax.f32 %v741, 0.0
        %v793 = vmax.f32 %v744, 0.0
        %v794 = vmax.f32 %v747, 0.0
        %v795 = vmax.f32 %v750, 0.0
        %v796 = vmax.f32 %v753, 0.0
        %v797 = vmax.f32 %v756, 0.0
        %v798 = vmax.f32 %v759, 0.0
        %v799 = vmax.f32 %v762, 0.0
        %v800 = vmax.f32 %v765, 0.0
        %v801 = vmax.f32 %v768, 0.0
        %v802 = vld [vmem:[%s5] sm:$0xff]
        %v803 = vld [vmem:[%s5 + $0x8] sm:$0xff]
        %v804 = vld [vmem:[%s5 + $0x10] sm:$0xff]
        %v805 = vld [vmem:[%s5 + $0x18] sm:$0xff]
        %v806 = vld [vmem:[%s6] sm:$0x1]
        %v808 = vperm.slane %v806, 0
        %vm810 = vcmask 261120
        %v812 = vsel %vm810, %v770, 0
        %v815 = vsel %vm810, %v771, 0
        %v818 = vsel %vm810, %v772, 0
        %v821 = vsel %vm810, %v773, 0
        %v824 = vsel %vm810, %v774, 0
        %v827 = vsel %vm810, %v775, 0
        %v830 = vsel %vm810, %v776, 0
        %v833 = vsel %vm810, %v777, 0
        %v836 = vsel %vm810, %v778, 0
        %v839 = vsel %vm810, %v779, 0
        %v842 = vsel %vm810, %v780, 0
        %v845 = vsel %vm810, %v781, 0
        %v848 = vsel %vm810, %v782, 0
        %v851 = vsel %vm810, %v783, 0
        %v854 = vsel %vm810, %v784, 0
        %v857 = vsel %vm810, %v785, 0
        %v860 = vsel %vm810, %v786, 0
        %v863 = vsel %vm810, %v787, 0
        %v866 = vsel %vm810, %v788, 0
        %v869 = vsel %vm810, %v789, 0
        %v872 = vsel %vm810, %v790, 0
        %v875 = vsel %vm810, %v791, 0
        %v878 = vsel %vm810, %v792, 0
        %v881 = vsel %vm810, %v793, 0
        %v884 = vsel %vm810, %v794, 0
        %v887 = vsel %vm810, %v795, 0
        %v890 = vsel %vm810, %v796, 0
        %v893 = vsel %vm810, %v797, 0
        %v896 = vsel %vm810, %v798, 0
        %v899 = vsel %vm810, %v799, 0
        %v902 = vsel %vm810, %v800, 0
        %v905 = vsel %vm810, %v801, 0
        %907 = vmatpush.msra.mxu0 0.0
        %908 = vmatpush.msra.mxu0 0.0
        %909 = vmatpush.msra.mxu0 0.0
        %910 = vmatpush.msra.mxu0 0.0
        %911 = vmatpush.msra.mxu0 0.0
        %912 = vmatpush.msra.mxu0 0.0
        %913 = vmatpush.msra.mxu0 0.0
        %914 = vmatpush.msra.mxu0 0.0
        %915 = vmatpush.msra.mxu0 0.0
        %916 = vmatpush.msra.mxu0 0.0
        %917 = vmatpush.msra.mxu0 0.0
        %918 = vmatpush.msra.mxu0 0.0
        %919 = vmatpush.msra.mxu0 %v805
        %920 = vmatpush.msra.mxu0 %v804
        %921 = vmatpush.msra.mxu0 %v803
        %922 = vmatpush.msra.mxu0 %v802
        %923 = vmatmul.f32.gmra.mxu0 %v812
        %v924 = vpop.f32.mrf.mxu0
        %v925 = vadd.f32 %v808, %v924
        %926 = vmatmul.f32.gmra.mxu0 %v815
        %v927 = vpop.f32.mrf.mxu0
        %v928 = vadd.f32 %v808, %v927
        %929 = vmatmul.f32.gmra.mxu0 %v818
        %v930 = vpop.f32.mrf.mxu0
        %v931 = vadd.f32 %v808, %v930
        %932 = vmatmul.f32.gmra.mxu0 %v821
        %v933 = vpop.f32.mrf.mxu0
        %v934 = vadd.f32 %v808, %v933
        %935 = vmatmul.f32.gmra.mxu0 %v824
        %v936 = vpop.f32.mrf.mxu0
        %v937 = vadd.f32 %v808, %v936
        %938 = vmatmul.f32.gmra.mxu0 %v827
        %v939 = vpop.f32.mrf.mxu0
        %v940 = vadd.f32 %v808, %v939
        %941 = vmatmul.f32.gmra.mxu0 %v830
        %v942 = vpop.f32.mrf.mxu0
        %v943 = vadd.f32 %v808, %v942
        %944 = vmatmul.f32.gmra.mxu0 %v833
        %v945 = vpop.f32.mrf.mxu0
        %v946 = vadd.f32 %v808, %v945
        %947 = vmatmul.f32.gmra.mxu0 %v836
        %v948 = vpop.f32.mrf.mxu0
        %v949 = vadd.f32 %v808, %v948
        %950 = vmatmul.f32.gmra.mxu0 %v839
        %v951 = vpop.f32.mrf.mxu0
        %v952 = vadd.f32 %v808, %v951
        %953 = vmatmul.f32.gmra.mxu0 %v842
        %v954 = vpop.f32.mrf.mxu0
        %v955 = vadd.f32 %v808, %v954
        %956 = vmatmul.f32.gmra.mxu0 %v845
        %v957 = vpop.f32.mrf.mxu0
        %v958 = vadd.f32 %v808, %v957
        %959 = vmatmul.f32.gmra.mxu0 %v848
        %v960 = vpop.f32.mrf.mxu0
        %v961 = vadd.f32 %v808, %v960
        %962 = vmatmul.f32.gmra.mxu0 %v851
        %v963 = vpop.f32.mrf.mxu0
        %v964 = vadd.f32 %v808, %v963
        %965 = vmatmul.f32.gmra.mxu0 %v854
        %v966 = vpop.f32.mrf.mxu0
        %v967 = vadd.f32 %v808, %v966
        %968 = vmatmul.f32.gmra.mxu0 %v857
        %v969 = vpop.f32.mrf.mxu0
        %v970 = vadd.f32 %v808, %v969
        %971 = vmatmul.f32.gmra.mxu0 %v860
        %v972 = vpop.f32.mrf.mxu0
        %v973 = vadd.f32 %v808, %v972
        %974 = vmatmul.f32.gmra.mxu0 %v863
        %v975 = vpop.f32.mrf.mxu0
        %v976 = vadd.f32 %v808, %v975
        %977 = vmatmul.f32.gmra.mxu0 %v866
        %v978 = vpop.f32.mrf.mxu0
        %v979 = vadd.f32 %v808, %v978
        %980 = vmatmul.f32.gmra.mxu0 %v869
        %v981 = vpop.f32.mrf.mxu0
        %v982 = vadd.f32 %v808, %v981
        %983 = vmatmul.f32.gmra.mxu0 %v872
        %v984 = vpop.f32.mrf.mxu0
        %v985 = vadd.f32 %v808, %v984
        %986 = vmatmul.f32.gmra.mxu0 %v875
        %v987 = vpop.f32.mrf.mxu0
        %v988 = vadd.f32 %v808, %v987
        %989 = vmatmul.f32.gmra.mxu0 %v878
        %v990 = vpop.f32.mrf.mxu0
        %v991 = vadd.f32 %v808, %v990
        %992 = vmatmul.f32.gmra.mxu0 %v881
        %v993 = vpop.f32.mrf.mxu0
        %v994 = vadd.f32 %v808, %v993
        %995 = vmatmul.f32.gmra.mxu0 %v884
        %v996 = vpop.f32.mrf.mxu0
        %v997 = vadd.f32 %v808, %v996
        %998 = vmatmul.f32.gmra.mxu0 %v887
        %v999 = vpop.f32.mrf.mxu0
        %v1000 = vadd.f32 %v808, %v999
        %1001 = vmatmul.f32.gmra.mxu0 %v890
        %v1002 = vpop.f32.mrf.mxu0
        %v1003 = vadd.f32 %v808, %v1002
        %1004 = vmatmul.f32.gmra.mxu0 %v893
        %v1005 = vpop.f32.mrf.mxu0
        %v1006 = vadd.f32 %v808, %v1005
        %1007 = vmatmul.f32.gmra.mxu0 %v896
        %v1008 = vpop.f32.mrf.mxu0
        %v1009 = vadd.f32 %v808, %v1008
        %1010 = vmatmul.f32.gmra.mxu0 %v899
        %v1011 = vpop.f32.mrf.mxu0
        %v1012 = vadd.f32 %v808, %v1011
        %1013 = vmatmul.f32.gmra.mxu0 %v902
        %v1014 = vpop.f32.mrf.mxu0
        %v1015 = vadd.f32 %v808, %v1014
        %1016 = vmatmul.f32.gmra.mxu0 %v905
        %v1017 = vpop.f32.mrf.mxu0
        %v1018 = vadd.f32 %v808, %v1017
        %1019 = vdwg.mxu0
        %v1020 = vmax.f32 %v925, 0.0
        %v1021 = vmax.f32 %v928, 0.0
        %v1022 = vmax.f32 %v931, 0.0
        %v1023 = vmax.f32 %v934, 0.0
        %v1024 = vmax.f32 %v937, 0.0
        %v1025 = vmax.f32 %v940, 0.0
        %v1026 = vmax.f32 %v943, 0.0
        %v1027 = vmax.f32 %v946, 0.0
        %v1028 = vmax.f32 %v949, 0.0
        %v1029 = vmax.f32 %v952, 0.0
        %v1030 = vmax.f32 %v955, 0.0
        %v1031 = vmax.f32 %v958, 0.0
        %v1032 = vmax.f32 %v961, 0.0
        %v1033 = vmax.f32 %v964, 0.0
        %v1034 = vmax.f32 %v967, 0.0
        %v1035 = vmax.f32 %v970, 0.0
        %v1036 = vmax.f32 %v973, 0.0
        %v1037 = vmax.f32 %v976, 0.0
        %v1038 = vmax.f32 %v979, 0.0
        %v1039 = vmax.f32 %v982, 0.0
        %v1040 = vmax.f32 %v985, 0.0
        %v1041 = vmax.f32 %v988, 0.0
        %v1042 = vmax.f32 %v991, 0.0
        %v1043 = vmax.f32 %v994, 0.0
        %v1044 = vmax.f32 %v997, 0.0
        %v1045 = vmax.f32 %v1000, 0.0
        %v1046 = vmax.f32 %v1003, 0.0
        %v1047 = vmax.f32 %v1006, 0.0
        %v1048 = vmax.f32 %v1009, 0.0
        %v1049 = vmax.f32 %v1012, 0.0
        %v1050 = vmax.f32 %v1015, 0.0
        %v1051 = vmax.f32 %v1018, 0.0
        %v1052 = vld [vmem:[%s7] sm:$0xff]
        %v1053 = vld [vmem:[%s7 + $0x8] sm:$0xff]
        %v1054 = vld [vmem:[%s7 + $0x10] sm:$0xff]
        %v1055 = vld [vmem:[%s7 + $0x18] sm:$0xff]
        %v1056 = vld [vmem:[%s8] sm:$0x1]
        %v1058 = vperm.slane %v1056, 0
        %v1061 = vsel %vm810, %v1020, 0
        %v1064 = vsel %vm810, %v1021, 0
        %v1067 = vsel %vm810, %v1022, 0
        %v1070 = vsel %vm810, %v1023, 0
        %v1073 = vsel %vm810, %v1024, 0
        %v1076 = vsel %vm810, %v1025, 0
        %v1079 = vsel %vm810, %v1026, 0
        %v1082 = vsel %vm810, %v1027, 0
        %v1085 = vsel %vm810, %v1028, 0
        %v1088 = vsel %vm810, %v1029, 0
        %v1091 = vsel %vm810, %v1030, 0
        %v1094 = vsel %vm810, %v1031, 0
        %v1097 = vsel %vm810, %v1032, 0
        %v1100 = vsel %vm810, %v1033, 0
        %v1103 = vsel %vm810, %v1034, 0
        %v1106 = vsel %vm810, %v1035, 0
        %v1109 = vsel %vm810, %v1036, 0
        %v1112 = vsel %vm810, %v1037, 0
        %v1115 = vsel %vm810, %v1038, 0
        %v1118 = vsel %vm810, %v1039, 0
        %v1121 = vsel %vm810, %v1040, 0
        %v1124 = vsel %vm810, %v1041, 0
        %v1127 = vsel %vm810, %v1042, 0
        %v1130 = vsel %vm810, %v1043, 0
        %v1133 = vsel %vm810, %v1044, 0
        %v1136 = vsel %vm810, %v1045, 0
        %v1139 = vsel %vm810, %v1046, 0
        %v1142 = vsel %vm810, %v1047, 0
        %v1145 = vsel %vm810, %v1048, 0
        %v1148 = vsel %vm810, %v1049, 0
        %v1151 = vsel %vm810, %v1050, 0
        %v1154 = vsel %vm810, %v1051, 0
        %1156 = vmatpush.msra.mxu0 0.0
        %1157 = vmatpush.msra.mxu0 0.0
        %1158 = vmatpush.msra.mxu0 0.0
        %1159 = vmatpush.msra.mxu0 0.0
        %1160 = vmatpush.msra.mxu0 0.0
        %1161 = vmatpush.msra.mxu0 0.0
        %1162 = vmatpush.msra.mxu0 0.0
        %1163 = vmatpush.msra.mxu0 0.0
        %1164 = vmatpush.msra.mxu0 0.0
        %1165 = vmatpush.msra.mxu0 0.0
        %1166 = vmatpush.msra.mxu0 0.0
        %1167 = vmatpush.msra.mxu0 0.0
        %1168 = vmatpush.msra.mxu0 %v1055
        %1169 = vmatpush.msra.mxu0 %v1054
        %1170 = vmatpush.msra.mxu0 %v1053
        %1171 = vmatpush.msra.mxu0 %v1052
        %1172 = vmatmul.f32.gmra.mxu0 %v1061
        %v1173 = vpop.f32.mrf.mxu0
        %v1174 = vadd.f32 %v1058, %v1173
        %1175 = vmatmul.f32.gmra.mxu0 %v1064
        %v1176 = vpop.f32.mrf.mxu0
        %v1177 = vadd.f32 %v1058, %v1176
        %1178 = vmatmul.f32.gmra.mxu0 %v1067
        %v1179 = vpop.f32.mrf.mxu0
        %v1180 = vadd.f32 %v1058, %v1179
        %1181 = vmatmul.f32.gmra.mxu0 %v1070
        %v1182 = vpop.f32.mrf.mxu0
        %v1183 = vadd.f32 %v1058, %v1182
        %1184 = vmatmul.f32.gmra.mxu0 %v1073
        %v1185 = vpop.f32.mrf.mxu0
        %v1186 = vadd.f32 %v1058, %v1185
        %1187 = vmatmul.f32.gmra.mxu0 %v1076
        %v1188 = vpop.f32.mrf.mxu0
        %v1189 = vadd.f32 %v1058, %v1188
        %1190 = vmatmul.f32.gmra.mxu0 %v1079
        %v1191 = vpop.f32.mrf.mxu0
        %v1192 = vadd.f32 %v1058, %v1191
        %1193 = vmatmul.f32.gmra.mxu0 %v1082
        %v1194 = vpop.f32.mrf.mxu0
        %v1195 = vadd.f32 %v1058, %v1194
        %1196 = vmatmul.f32.gmra.mxu0 %v1085
        %v1197 = vpop.f32.mrf.mxu0
        %v1198 = vadd.f32 %v1058, %v1197
        %1199 = vmatmul.f32.gmra.mxu0 %v1088
        %v1200 = vpop.f32.mrf.mxu0
        %v1201 = vadd.f32 %v1058, %v1200
        %1202 = vmatmul.f32.gmra.mxu0 %v1091
        %v1203 = vpop.f32.mrf.mxu0
        %v1204 = vadd.f32 %v1058, %v1203
        %1205 = vmatmul.f32.gmra.mxu0 %v1094
        %v1206 = vpop.f32.mrf.mxu0
        %v1207 = vadd.f32 %v1058, %v1206
        %1208 = vmatmul.f32.gmra.mxu0 %v1097
        %v1209 = vpop.f32.mrf.mxu0
        %v1210 = vadd.f32 %v1058, %v1209
        %1211 = vmatmul.f32.gmra.mxu0 %v1100
        %v1212 = vpop.f32.mrf.mxu0
        %v1213 = vadd.f32 %v1058, %v1212
        %1214 = vmatmul.f32.gmra.mxu0 %v1103
        %v1215 = vpop.f32.mrf.mxu0
        %v1216 = vadd.f32 %v1058, %v1215
        %1217 = vmatmul.f32.gmra.mxu0 %v1106
        %v1218 = vpop.f32.mrf.mxu0
        %v1219 = vadd.f32 %v1058, %v1218
        %1220 = vmatmul.f32.gmra.mxu0 %v1109
        %v1221 = vpop.f32.mrf.mxu0
        %v1222 = vadd.f32 %v1058, %v1221
        %1223 = vmatmul.f32.gmra.mxu0 %v1112
        %v1224 = vpop.f32.mrf.mxu0
        %v1225 = vadd.f32 %v1058, %v1224
        %1226 = vmatmul.f32.gmra.mxu0 %v1115
        %v1227 = vpop.f32.mrf.mxu0
        %v1228 = vadd.f32 %v1058, %v1227
        %1229 = vmatmul.f32.gmra.mxu0 %v1118
        %v1230 = vpop.f32.mrf.mxu0
        %v1231 = vadd.f32 %v1058, %v1230
        %1232 = vmatmul.f32.gmra.mxu0 %v1121
        %v1233 = vpop.f32.mrf.mxu0
        %v1234 = vadd.f32 %v1058, %v1233
        %1235 = vmatmul.f32.gmra.mxu0 %v1124
        %v1236 = vpop.f32.mrf.mxu0
        %v1237 = vadd.f32 %v1058, %v1236
        %1238 = vmatmul.f32.gmra.mxu0 %v1127
        %v1239 = vpop.f32.mrf.mxu0
        %v1240 = vadd.f32 %v1058, %v1239
        %1241 = vmatmul.f32.gmra.mxu0 %v1130
        %v1242 = vpop.f32.mrf.mxu0
        %v1243 = vadd.f32 %v1058, %v1242
        %1244 = vmatmul.f32.gmra.mxu0 %v1133
        %v1245 = vpop.f32.mrf.mxu0
        %v1246 = vadd.f32 %v1058, %v1245
        %1247 = vmatmul.f32.gmra.mxu0 %v1136
        %v1248 = vpop.f32.mrf.mxu0
        %v1249 = vadd.f32 %v1058, %v1248
        %1250 = vmatmul.f32.gmra.mxu0 %v1139
        %v1251 = vpop.f32.mrf.mxu0
        %v1252 = vadd.f32 %v1058, %v1251
        %1253 = vmatmul.f32.gmra.mxu0 %v1142
        %v1254 = vpop.f32.mrf.mxu0
        %v1255 = vadd.f32 %v1058, %v1254
        %1256 = vmatmul.f32.gmra.mxu0 %v1145
        %v1257 = vpop.f32.mrf.mxu0
        %v1258 = vadd.f32 %v1058, %v1257
        %1259 = vmatmul.f32.gmra.mxu0 %v1148
        %v1260 = vpop.f32.mrf.mxu0
        %v1261 = vadd.f32 %v1058, %v1260
        %1262 = vmatmul.f32.gmra.mxu0 %v1151
        %v1263 = vpop.f32.mrf.mxu0
        %v1264 = vadd.f32 %v1058, %v1263
        %1265 = vmatmul.f32.gmra.mxu0 %v1154
        %v1266 = vpop.f32.mrf.mxu0
        %v1267 = vadd.f32 %v1058, %v1266
        %1268 = vdwg.mxu0
        %vm1269 = vcmask 15360
        %1270 = vst.msk [vmem:[%s334] sm:$0xff] %vm1269, %v1174
        %1271 = vst.msk [vmem:[%s334 + $0x8] sm:$0xff] %vm1269, %v1177
        %1272 = vst.msk [vmem:[%s334 + $0x10] sm:$0xff] %vm1269, %v1180
        %1273 = vst.msk [vmem:[%s334 + $0x18] sm:$0xff] %vm1269, %v1183
        %1274 = vst.msk [vmem:[%s334 + $0x20] sm:$0xff] %vm1269, %v1186
        %1275 = vst.msk [vmem:[%s334 + $0x28] sm:$0xff] %vm1269, %v1189
        %1276 = vst.msk [vmem:[%s334 + $0x30] sm:$0xff] %vm1269, %v1192
        %1277 = vst.msk [vmem:[%s334 + $0x38] sm:$0xff] %vm1269, %v1195
        %1278 = vst.msk [vmem:[%s334 + $0x40] sm:$0xff] %vm1269, %v1198
        %1279 = vst.msk [vmem:[%s334 + $0x48] sm:$0xff] %vm1269, %v1201
        %1280 = vst.msk [vmem:[%s334 + $0x50] sm:$0xff] %vm1269, %v1204
        %1281 = vst.msk [vmem:[%s334 + $0x58] sm:$0xff] %vm1269, %v1207
        %1282 = vst.msk [vmem:[%s334 + $0x60] sm:$0xff] %vm1269, %v1210
        %1283 = vst.msk [vmem:[%s334 + $0x68] sm:$0xff] %vm1269, %v1213
        %1284 = vst.msk [vmem:[%s334 + $0x70] sm:$0xff] %vm1269, %v1216
        %1285 = vst.msk [vmem:[%s334 + $0x78] sm:$0xff] %vm1269, %v1219
        %1286 = vst.msk [vmem:[%s334 + $0x80] sm:$0xff] %vm1269, %v1222
        %1287 = vst.msk [vmem:[%s334 + $0x88] sm:$0xff] %vm1269, %v1225
        %1288 = vst.msk [vmem:[%s334 + $0x90] sm:$0xff] %vm1269, %v1228
        %1289 = vst.msk [vmem:[%s334 + $0x98] sm:$0xff] %vm1269, %v1231
        %1290 = vst.msk [vmem:[%s334 + $0xa0] sm:$0xff] %vm1269, %v1234
        %1291 = vst.msk [vmem:[%s334 + $0xa8] sm:$0xff] %vm1269, %v1237
        %1292 = vst.msk [vmem:[%s334 + $0xb0] sm:$0xff] %vm1269, %v1240
        %1293 = vst.msk [vmem:[%s334 + $0xb8] sm:$0xff] %vm1269, %v1243
        %1294 = vst.msk [vmem:[%s334 + $0xc0] sm:$0xff] %vm1269, %v1246
        %1295 = vst.msk [vmem:[%s334 + $0xc8] sm:$0xff] %vm1269, %v1249
        %1296 = vst.msk [vmem:[%s334 + $0xd0] sm:$0xff] %vm1269, %v1252
        %1297 = vst.msk [vmem:[%s334 + $0xd8] sm:$0xff] %vm1269, %v1255
        %1298 = vst.msk [vmem:[%s334 + $0xe0] sm:$0xff] %vm1269, %v1258
        %1299 = vst.msk [vmem:[%s334 + $0xe8] sm:$0xff] %vm1269, %v1261
        %1300 = vst.msk [vmem:[%s334 + $0xf0] sm:$0xff] %vm1269, %v1264
        %1301 = vst.msk [vmem:[%s334 + $0xf8] sm:$0xff] %vm1269, %v1267
        %s1302 = sand.u32 %s222, 1
        %s1303 = sand.u32 %s222, 1
        %s1304 = smul.addr %s1303, 256
        %s1305 = scalar_lea.vmem [#allocation2], %s1304
        // Predicated region
        $region57: #{tpu_custom_call.1} parent=55 // pred_check
          %p1306 = pneg %p232
        $region58: #{tpu_custom_call.1} parent=55 // pred_check_branch
          %1308 = sbr.rel (%p1306) target = $region60
        $region59: #{tpu_custom_call.1} parent=55 // pred_region
          %s1309 = smul.u32 32, %s20
          %s1310 = ssub.s32 125, %s1309
          %p1311 = scmp.lt.s32.totalorder %s1310, 32
          %s1312 = scalar_select %p1311, %s1310, 32
          %s1313 = smul.u32 8, %s1312
          %p1314 = scmp.ne.s32.totalorder 0, %s1313
          %s1315 = smul.addr %s1309, 8
          %s1316 = scalar_lea.vmem %s9, %s1315
          // Predicated region
          $region61: #{tpu_custom_call.1} parent=59 // pred_check
            %p1317 = pneg %p1314
          $region62: #{tpu_custom_call.1} parent=59 // pred_check_branch
            %1319 = sbr.rel (%p1317) target = $region64
          $region63: #{tpu_custom_call.1} parent=59 // pred_region
            // Predicated region
            $region65: #{tpu_custom_call.1} parent=63 // pred_check
              _
            $region66: #{tpu_custom_call.1} parent=63 // pred_check_branch
              %1321 = sbr.rel (0) target = $region68
            $region67: #{tpu_custom_call.1} parent=63 // pred_region
              // Predicated region
              $region87: #{tpu_custom_call.1} parent=67 // pred_check
                _
              $region88: #{tpu_custom_call.1} parent=67 // pred_check_branch
                %1433 = sbr.rel (0) target = $region90
              $region89: #{tpu_custom_call.1} parent=67 // pred_region
                %s1434 = sshrl.u32 %s1312, 5
                // While loop
                $region91: #{tpu_custom_call.1} parent=89 // loop_pre_header
                  _
                $region92: #{tpu_custom_call.1} parent=89 // loop_header
                  %s1436 = sphi 0, %s1438
                  %p1437 = scmp.ge.s32.totalorder %s1436, %s1434
                  %s1441 = sphi 0, %s1510
                  %s1442 = sphi %s1305, %s1513
                  %s1443 = sphi %s1316, %s1514
                $region93: #{tpu_custom_call.1} parent=89 // loop_header_branch
                  %1440 = sbr.rel (%p1437) target = $region97
                $region94: #{tpu_custom_call.1} parent=89 // loop_body
                  %v1444 = vld [vmem:[%s1442] sm:$0xff]
                  %1445 = vst [vmem:[%s1443] sm:$0xff] %v1444
                  %v1446 = vld [vmem:[%s1442 + $0x8] sm:$0xff]
                  %1447 = vst [vmem:[%s1443 + $0x8] sm:$0xff] %v1446
                  %v1448 = vld [vmem:[%s1442 + $0x10] sm:$0xff]
                  %1449 = vst [vmem:[%s1443 + $0x10] sm:$0xff] %v1448
                  %v1450 = vld [vmem:[%s1442 + $0x18] sm:$0xff]
                  %1451 = vst [vmem:[%s1443 + $0x18] sm:$0xff] %v1450
                  %v1452 = vld [vmem:[%s1442 + $0x20] sm:$0xff]
                  %1453 = vst [vmem:[%s1443 + $0x20] sm:$0xff] %v1452
                  %v1454 = vld [vmem:[%s1442 + $0x28] sm:$0xff]
                  %1455 = vst [vmem:[%s1443 + $0x28] sm:$0xff] %v1454
                  %v1456 = vld [vmem:[%s1442 + $0x30] sm:$0xff]
                  %1457 = vst [vmem:[%s1443 + $0x30] sm:$0xff] %v1456
                  %v1458 = vld [vmem:[%s1442 + $0x38] sm:$0xff]
                  %1459 = vst [vmem:[%s1443 + $0x38] sm:$0xff] %v1458
                  %v1460 = vld [vmem:[%s1442 + $0x40] sm:$0xff]
                  %1461 = vst [vmem:[%s1443 + $0x40] sm:$0xff] %v1460
                  %v1462 = vld [vmem:[%s1442 + $0x48] sm:$0xff]
                  %1463 = vst [vmem:[%s1443 + $0x48] sm:$0xff] %v1462
                  %v1464 = vld [vmem:[%s1442 + $0x50] sm:$0xff]
                  %1465 = vst [vmem:[%s1443 + $0x50] sm:$0xff] %v1464
                  %v1466 = vld [vmem:[%s1442 + $0x58] sm:$0xff]
                  %1467 = vst [vmem:[%s1443 + $0x58] sm:$0xff] %v1466
                  %v1468 = vld [vmem:[%s1442 + $0x60] sm:$0xff]
                  %1469 = vst [vmem:[%s1443 + $0x60] sm:$0xff] %v1468
                  %v1470 = vld [vmem:[%s1442 + $0x68] sm:$0xff]
                  %1471 = vst [vmem:[%s1443 + $0x68] sm:$0xff] %v1470
                  %v1472 = vld [vmem:[%s1442 + $0x70] sm:$0xff]
                  %1473 = vst [vmem:[%s1443 + $0x70] sm:$0xff] %v1472
                  %v1474 = vld [vmem:[%s1442 + $0x78] sm:$0xff]
                  %1475 = vst [vmem:[%s1443 + $0x78] sm:$0xff] %v1474
                  %v1476 = vld [vmem:[%s1442 + $0x80] sm:$0xff]
                  %1477 = vst [vmem:[%s1443 + $0x80] sm:$0xff] %v1476
                  %v1478 = vld [vmem:[%s1442 + $0x88] sm:$0xff]
                  %1479 = vst [vmem:[%s1443 + $0x88] sm:$0xff] %v1478
                  %v1480 = vld [vmem:[%s1442 + $0x90] sm:$0xff]
                  %1481 = vst [vmem:[%s1443 + $0x90] sm:$0xff] %v1480
                  %v1482 = vld [vmem:[%s1442 + $0x98] sm:$0xff]
                  %1483 = vst [vmem:[%s1443 + $0x98] sm:$0xff] %v1482
                  %v1484 = vld [vmem:[%s1442 + $0xa0] sm:$0xff]
                  %1485 = vst [vmem:[%s1443 + $0xa0] sm:$0xff] %v1484
                  %v1486 = vld [vmem:[%s1442 + $0xa8] sm:$0xff]
                  %1487 = vst [vmem:[%s1443 + $0xa8] sm:$0xff] %v1486
                  %v1488 = vld [vmem:[%s1442 + $0xb0] sm:$0xff]
                  %1489 = vst [vmem:[%s1443 + $0xb0] sm:$0xff] %v1488
                  %v1490 = vld [vmem:[%s1442 + $0xb8] sm:$0xff]
                  %1491 = vst [vmem:[%s1443 + $0xb8] sm:$0xff] %v1490
                  %v1492 = vld [vmem:[%s1442 + $0xc0] sm:$0xff]
                  %1493 = vst [vmem:[%s1443 + $0xc0] sm:$0xff] %v1492
                  %v1494 = vld [vmem:[%s1442 + $0xc8] sm:$0xff]
                  %1495 = vst [vmem:[%s1443 + $0xc8] sm:$0xff] %v1494
                  %v1496 = vld [vmem:[%s1442 + $0xd0] sm:$0xff]
                  %1497 = vst [vmem:[%s1443 + $0xd0] sm:$0xff] %v1496
                  %v1498 = vld [vmem:[%s1442 + $0xd8] sm:$0xff]
                  %1499 = vst [vmem:[%s1443 + $0xd8] sm:$0xff] %v1498
                  %v1500 = vld [vmem:[%s1442 + $0xe0] sm:$0xff]
                  %1501 = vst [vmem:[%s1443 + $0xe0] sm:$0xff] %v1500
                  %v1502 = vld [vmem:[%s1442 + $0xe8] sm:$0xff]
                  %1503 = vst [vmem:[%s1443 + $0xe8] sm:$0xff] %v1502
                  %v1504 = vld [vmem:[%s1442 + $0xf0] sm:$0xff]
                  %1505 = vst [vmem:[%s1443 + $0xf0] sm:$0xff] %v1504
                  %v1506 = vld [vmem:[%s1442 + $0xf8] sm:$0xff]
                  %1507 = vst [vmem:[%s1443 + $0xf8] sm:$0xff] %v1506
                  %s1508 = sadd.s32 1, %s1441
                  %p1509 = scmp.ge.s32.totalorder %s1508, %s1434
                  %s1510 = scalar_select %p1509, 0, %s1508
                  %s1511 = smul.u32 %s1510, 256
                  %s1512 = smul.u32 %s1510, 256
                  %s1513 = scalar_lea.vmem %s1305, %s1511 [#allocation2]
                  %s1514 = scalar_lea.vmem %s1316, %s1512
                $region95: #{tpu_custom_call.1} parent=89 // loop_footer
                  %s1438 = sadd.s32 %s1436, 1
                $region96: #{tpu_custom_call.1} parent=89 // loop_footer_branch
                  %1435 = sbr.rel target = $region92
                $region97: #{tpu_custom_call.1} parent=89 // loop_exit
                  _
                %s1515 = sshrl.u32 %s1312, 5
                %s1516 = sand.u32 %s1312, 31
                %s1517 = smul.u32 %s1515, 32
                %s1518 = smul.u32 8, %s1517
                %s1519 = scalar_lea.vmem %s1305, %s1518 [#allocation2]
                %s1520 = smul.u32 8, %s1517
                %s1521 = scalar_lea.vmem %s1316, %s1520
                // While loop
                $region98: #{tpu_custom_call.1} parent=89 // loop_pre_header
                  _
                $region99: #{tpu_custom_call.1} parent=89 // loop_header
                  %s1523 = sphi 0, %s1525
                  %p1524 = scmp.ge.s32.totalorder %s1523, %s1516
                  %s1528 = sphi 0, %s1535
                  %s1529 = sphi %s1519, %s1538
                  %s1530 = sphi %s1521, %s1539
                $region100: #{tpu_custom_call.1} parent=89 // loop_header_branch
                  %1527 = sbr.rel (%p1524) target = $region104
                $region101: #{tpu_custom_call.1} parent=89 // loop_body
                  %v1531 = vld [vmem:[%s1529] sm:$0xff]
                  %1532 = vst [vmem:[%s1530] sm:$0xff] %v1531
                  %s1533 = sadd.s32 1, %s1528
                  %p1534 = scmp.ge.s32.totalorder %s1533, %s1516
                  %s1535 = scalar_select %p1534, 0, %s1533
                  %s1536 = smul.u32 %s1535, 8
                  %s1537 = smul.u32 %s1535, 8
                  %s1538 = scalar_lea.vmem %s1519, %s1536 [#allocation2]
                  %s1539 = scalar_lea.vmem %s1521, %s1537
                $region102: #{tpu_custom_call.1} parent=89 // loop_footer
                  %s1525 = sadd.s32 %s1523, 1
                $region103: #{tpu_custom_call.1} parent=89 // loop_footer_branch
                  %1522 = sbr.rel target = $region99
                $region104: #{tpu_custom_call.1} parent=89 // loop_exit
                  _
              $region90: #{tpu_custom_call.1} parent=67 // pred_fallthru
                _
              // Predicated region
              $region105: #{tpu_custom_call.1} parent=67 // pred_check
                _
              $region106: #{tpu_custom_call.1} parent=67 // pred_check_branch
                %1541 = sbr.rel target = $region108
              $region107: #{tpu_custom_call.1} parent=67 // pred_region
                _
              $region108: #{tpu_custom_call.1} parent=67 // pred_fallthru
                _
            $region68: #{tpu_custom_call.1} parent=63 // pred_fallthru
              _
            // Predicated region
            $region69: #{tpu_custom_call.1} parent=63 // pred_check
              _
            $region70: #{tpu_custom_call.1} parent=63 // pred_check_branch
              %1323 = sbr.rel target = $region72
            $region71: #{tpu_custom_call.1} parent=63 // pred_region
              %s1325 = ssub.s32 256, 1
              %s1326 = sshrl.u32 %s1312, 5
              // While loop
              $region73: #{tpu_custom_call.1} parent=71 // loop_pre_header
                _
              $region74: #{tpu_custom_call.1} parent=71 // loop_header
                %s1328 = sphi 0, %s1330
                %p1329 = scmp.ge.s32.totalorder %s1328, %s1326
                %s1333 = sphi 0, %s1402
                %s1334 = sphi %s1305, %s1405
                %s1335 = sphi %s1316, %s1406
              $region75: #{tpu_custom_call.1} parent=71 // loop_header_branch
                %1332 = sbr.rel (%p1329) target = $region79
              $region76: #{tpu_custom_call.1} parent=71 // loop_body
                %v1336 = vld [vmem:[%s1334] sm:%s1325]
                %1337 = vst [vmem:[%s1335] sm:%s1325] %v1336
                %v1338 = vld [vmem:[%s1334 + $0x8] sm:%s1325]
                %1339 = vst [vmem:[%s1335 + $0x8] sm:%s1325] %v1338
                %v1340 = vld [vmem:[%s1334 + $0x10] sm:%s1325]
                %1341 = vst [vmem:[%s1335 + $0x10] sm:%s1325] %v1340
                %v1342 = vld [vmem:[%s1334 + $0x18] sm:%s1325]
                %1343 = vst [vmem:[%s1335 + $0x18] sm:%s1325] %v1342
                %v1344 = vld [vmem:[%s1334 + $0x20] sm:%s1325]
                %1345 = vst [vmem:[%s1335 + $0x20] sm:%s1325] %v1344
                %v1346 = vld [vmem:[%s1334 + $0x28] sm:%s1325]
                %1347 = vst [vmem:[%s1335 + $0x28] sm:%s1325] %v1346
                %v1348 = vld [vmem:[%s1334 + $0x30] sm:%s1325]
                %1349 = vst [vmem:[%s1335 + $0x30] sm:%s1325] %v1348
                %v1350 = vld [vmem:[%s1334 + $0x38] sm:%s1325]
                %1351 = vst [vmem:[%s1335 + $0x38] sm:%s1325] %v1350
                %v1352 = vld [vmem:[%s1334 + $0x40] sm:%s1325]
                %1353 = vst [vmem:[%s1335 + $0x40] sm:%s1325] %v1352
                %v1354 = vld [vmem:[%s1334 + $0x48] sm:%s1325]
                %1355 = vst [vmem:[%s1335 + $0x48] sm:%s1325] %v1354
                %v1356 = vld [vmem:[%s1334 + $0x50] sm:%s1325]
                %1357 = vst [vmem:[%s1335 + $0x50] sm:%s1325] %v1356
                %v1358 = vld [vmem:[%s1334 + $0x58] sm:%s1325]
                %1359 = vst [vmem:[%s1335 + $0x58] sm:%s1325] %v1358
                %v1360 = vld [vmem:[%s1334 + $0x60] sm:%s1325]
                %1361 = vst [vmem:[%s1335 + $0x60] sm:%s1325] %v1360
                %v1362 = vld [vmem:[%s1334 + $0x68] sm:%s1325]
                %1363 = vst [vmem:[%s1335 + $0x68] sm:%s1325] %v1362
                %v1364 = vld [vmem:[%s1334 + $0x70] sm:%s1325]
                %1365 = vst [vmem:[%s1335 + $0x70] sm:%s1325] %v1364
                %v1366 = vld [vmem:[%s1334 + $0x78] sm:%s1325]
                %1367 = vst [vmem:[%s1335 + $0x78] sm:%s1325] %v1366
                %v1368 = vld [vmem:[%s1334 + $0x80] sm:%s1325]
                %1369 = vst [vmem:[%s1335 + $0x80] sm:%s1325] %v1368
                %v1370 = vld [vmem:[%s1334 + $0x88] sm:%s1325]
                %1371 = vst [vmem:[%s1335 + $0x88] sm:%s1325] %v1370
                %v1372 = vld [vmem:[%s1334 + $0x90] sm:%s1325]
                %1373 = vst [vmem:[%s1335 + $0x90] sm:%s1325] %v1372
                %v1374 = vld [vmem:[%s1334 + $0x98] sm:%s1325]
                %1375 = vst [vmem:[%s1335 + $0x98] sm:%s1325] %v1374
                %v1376 = vld [vmem:[%s1334 + $0xa0] sm:%s1325]
                %1377 = vst [vmem:[%s1335 + $0xa0] sm:%s1325] %v1376
                %v1378 = vld [vmem:[%s1334 + $0xa8] sm:%s1325]
                %1379 = vst [vmem:[%s1335 + $0xa8] sm:%s1325] %v1378
                %v1380 = vld [vmem:[%s1334 + $0xb0] sm:%s1325]
                %1381 = vst [vmem:[%s1335 + $0xb0] sm:%s1325] %v1380
                %v1382 = vld [vmem:[%s1334 + $0xb8] sm:%s1325]
                %1383 = vst [vmem:[%s1335 + $0xb8] sm:%s1325] %v1382
                %v1384 = vld [vmem:[%s1334 + $0xc0] sm:%s1325]
                %1385 = vst [vmem:[%s1335 + $0xc0] sm:%s1325] %v1384
                %v1386 = vld [vmem:[%s1334 + $0xc8] sm:%s1325]
                %1387 = vst [vmem:[%s1335 + $0xc8] sm:%s1325] %v1386
                %v1388 = vld [vmem:[%s1334 + $0xd0] sm:%s1325]
                %1389 = vst [vmem:[%s1335 + $0xd0] sm:%s1325] %v1388
                %v1390 = vld [vmem:[%s1334 + $0xd8] sm:%s1325]
                %1391 = vst [vmem:[%s1335 + $0xd8] sm:%s1325] %v1390
                %v1392 = vld [vmem:[%s1334 + $0xe0] sm:%s1325]
                %1393 = vst [vmem:[%s1335 + $0xe0] sm:%s1325] %v1392
                %v1394 = vld [vmem:[%s1334 + $0xe8] sm:%s1325]
                %1395 = vst [vmem:[%s1335 + $0xe8] sm:%s1325] %v1394
                %v1396 = vld [vmem:[%s1334 + $0xf0] sm:%s1325]
                %1397 = vst [vmem:[%s1335 + $0xf0] sm:%s1325] %v1396
                %v1398 = vld [vmem:[%s1334 + $0xf8] sm:%s1325]
                %1399 = vst [vmem:[%s1335 + $0xf8] sm:%s1325] %v1398
                %s1400 = sadd.s32 1, %s1333
                %p1401 = scmp.ge.s32.totalorder %s1400, %s1326
                %s1402 = scalar_select %p1401, 0, %s1400
                %s1403 = smul.u32 %s1402, 256
                %s1404 = smul.u32 %s1402, 256
                %s1405 = scalar_lea.vmem %s1305, %s1403 [#allocation2]
                %s1406 = scalar_lea.vmem %s1316, %s1404
              $region77: #{tpu_custom_call.1} parent=71 // loop_footer
                %s1330 = sadd.s32 %s1328, 1
              $region78: #{tpu_custom_call.1} parent=71 // loop_footer_branch
                %1327 = sbr.rel target = $region74
              $region79: #{tpu_custom_call.1} parent=71 // loop_exit
                _
              %s1407 = sshrl.u32 %s1312, 5
              %s1408 = sand.u32 %s1312, 31
              %s1409 = smul.u32 %s1407, 32
              %s1410 = smul.u32 8, %s1409
              %s1411 = scalar_lea.vmem %s1305, %s1410 [#allocation2]
              %s1412 = smul.u32 8, %s1409
              %s1413 = scalar_lea.vmem %s1316, %s1412
              // While loop
              $region80: #{tpu_custom_call.1} parent=71 // loop_pre_header
                _
              $region81: #{tpu_custom_call.1} parent=71 // loop_header
                %s1415 = sphi 0, %s1417
                %p1416 = scmp.ge.s32.totalorder %s1415, %s1408
                %s1420 = sphi 0, %s1427
                %s1421 = sphi %s1411, %s1430
                %s1422 = sphi %s1413, %s1431
              $region82: #{tpu_custom_call.1} parent=71 // loop_header_branch
                %1419 = sbr.rel (%p1416) target = $region86
              $region83: #{tpu_custom_call.1} parent=71 // loop_body
                %v1423 = vld [vmem:[%s1421] sm:%s1325]
                %1424 = vst [vmem:[%s1422] sm:%s1325] %v1423
                %s1425 = sadd.s32 1, %s1420
                %p1426 = scmp.ge.s32.totalorder %s1425, %s1408
                %s1427 = scalar_select %p1426, 0, %s1425
                %s1428 = smul.u32 %s1427, 8
                %s1429 = smul.u32 %s1427, 8
                %s1430 = scalar_lea.vmem %s1411, %s1428 [#allocation2]
                %s1431 = scalar_lea.vmem %s1413, %s1429
              $region84: #{tpu_custom_call.1} parent=71 // loop_footer
                %s1417 = sadd.s32 %s1415, 1
              $region85: #{tpu_custom_call.1} parent=71 // loop_footer_branch
                %1414 = sbr.rel target = $region81
              $region86: #{tpu_custom_call.1} parent=71 // loop_exit
                _
            $region72: #{tpu_custom_call.1} parent=63 // pred_fallthru
              _
          $region64: #{tpu_custom_call.1} parent=59 // pred_fallthru
            _
          %1542 = vnop
        $region60: #{tpu_custom_call.1} parent=55 // pred_fallthru
          _
      $region56: #{tpu_custom_call.1} parent=5 // pred_fallthru
        _
      %p1543 = scmp.le.s32.totalorder 2, %s15
      // Predicated region
      $region109: #{tpu_custom_call.1} parent=5 // pred_check
        %p1544 = pneg %p1543
      $region110: #{tpu_custom_call.1} parent=5 // pred_check_branch
        %1546 = sbr.rel (%p1544) target = $region112
      $region111: #{tpu_custom_call.1} parent=5 // pred_region
        %s1547 = ssub.s32 %s15, 2
        // Predicated region
        $region113: #{tpu_custom_call.1} parent=111 // pred_check
          %p1548 = pneg %p238
        $region114: #{tpu_custom_call.1} parent=111 // pred_check_branch
          %1550 = sbr.rel (%p1548) target = $region116
        $region115: #{tpu_custom_call.1} parent=111 // pred_region
          %s1551 = sand.u32 %s223, 1
          %s1552 = sand.u32 %s223, 1
          %s1553 = smul.addr %s1552, 256
          %s1554 = scalar_lea.vmem [#allocation2], %s1553
        $region116: #{tpu_custom_call.1} parent=111 // pred_fallthru
          _
      $region112: #{tpu_custom_call.1} parent=5 // pred_fallthru
        _
    $region6: #{tpu_custom_call.1} parent=1 // loop_footer
      %s19 = sadd.s32 1, %s15
    $region7: #{tpu_custom_call.1} parent=1 // loop_footer_branch
      %14 = sbr.rel target = $region3
    $region8: #{tpu_custom_call.1} parent=1 // loop_exit
      _

</llo_original>
